<compile_context>
chip_gen: v6e
topology: v6e:2x2x1
jax: 0.10.0
libtpu: 0.0.40
codegen_flags: <defaults>
</compile_context>

<pallas_src>
import functools

import jax
import jax.numpy as jnp
from jax import lax
from jax.experimental import pallas as pl
from jax.experimental.pallas import tpu as pltpu

_NEG_INF = -1e30
_LANE = 128
_VMEM_LIMIT = 32 * 1024 * 1024


def _leaky01(v):
    # nn.LeakyReLU() default negative_slope = 0.01
    return jnp.where(v > 0, v, 0.01 * v)


def _gat_conv(x_f32, adj, w_bf, a_src, a_dst, bias):
    """Dense single-head GATConv on one graph block (all operands already in VMEM)."""
    bf, f32 = jnp.bfloat16, jnp.float32
    h = jnp.dot(x_f32.astype(bf), w_bf, preferred_element_type=f32)          # (n, 128) f32
    hb = h.astype(bf)
    # Rank-1 attention terms (no (n,n) broadcast matmul, no explicit H transpose).
    e_dst = jnp.sum(h * a_dst, axis=1, keepdims=True)                        # (n, 1): row i
    e_src = lax.dot_general(a_src.astype(bf), hb,
                            (((1,), (1,)), ((), ())),
                            preferred_element_type=f32)                      # (1, n): col j
    logits = e_dst + e_src                                                   # (n, n)
    logits = jnp.where(logits > 0, logits, 0.2 * logits)                     # GAT slope 0.2
    logits = jnp.where(adj > 0, logits, _NEG_INF)                            # edges + self loops
    m = jnp.max(logits, axis=1, keepdims=True)
    p = jnp.exp(logits - m)
    alpha = p / jnp.sum(p, axis=1, keepdims=True)        # attention dropout: eval -> identity
    return jnp.dot(alpha.astype(bf), hb, preferred_element_type=f32) + bias  # (n, 128) f32


# ----------------------------------------------------------------------------
# Single fused kernel: both GAT branches + global mean pools + full MLP tail
# ----------------------------------------------------------------------------
def _attgnn_kernel(x1_ref, adj1_ref, pool1_ref, x2_ref, adj2_ref, pool2_ref,
                   w1_ref, as1_ref, ad1_ref, gb1_ref,
                   w2_ref, as2_ref, ad2_ref, gb2_ref,
                   p1w_ref, p1b_ref, p2w_ref, p2b_ref,
                   f1a_ref, f1b_ref, f1bias_ref,
                   f2w_ref, f2b_ref, ow_ref, ob_ref,
                   o_ref):
    bf, f32 = jnp.bfloat16, jnp.float32

    # --- branch 1: x = LeakyReLU(pro1_fc1(gep(LeakyReLU(GAT1(x))))) ---
    y1 = _gat_conv(x1_ref[...], adj1_ref[...], w1_ref[...],
                   as1_ref[...], ad1_ref[...], gb1_ref[...])
    y1 = _leaky01(y1)
    x_pool = jnp.dot(pool1_ref[...], y1.astype(bf), preferred_element_type=f32)   # (B, 128)
    x_feat = _leaky01(jnp.dot(x_pool.astype(bf), p1w_ref[...],
                              preferred_element_type=f32) + p1b_ref[...])          # (B, D)

    # --- branch 2: xt = LeakyReLU(gep(LeakyReLU(pro2_fc1(GAT2(xt))))) ---
    y2 = _gat_conv(x2_ref[...], adj2_ref[...], w2_ref[...],
                   as2_ref[...], ad2_ref[...], gb2_ref[...])
    y2 = _leaky01(jnp.dot(y2.astype(bf), p2w_ref[...],
                          preferred_element_type=f32) + p2b_ref[...])               # (n, D)
    xt_feat = _leaky01(jnp.dot(pool2_ref[...], y2.astype(bf),
                               preferred_element_type=f32))                         # (B, D)

    # --- tail: cat -> fc1 -> LeakyReLU -> fc2 -> LeakyReLU -> out -> sigmoid ---
    # cat([x, xt], 1) @ W1 == x @ W1[:D] + xt @ W1[D:]  (concat fused away, split at init)
    z = _leaky01(jnp.dot(x_feat.astype(bf), f1a_ref[...], preferred_element_type=f32)
                 + jnp.dot(xt_feat.astype(bf), f1b_ref[...], preferred_element_type=f32)
                 + f1bias_ref[...])
    z = _leaky01(jnp.dot(z.astype(bf), f2w_ref[...], preferred_element_type=f32)
                 + f2b_ref[...])
    # Output layer lane-padded to 128 columns so the final store is lane-dense.
    z = jnp.dot(z.astype(bf), ow_ref[...], preferred_element_type=f32) + ob_ref[...]
    o_ref[...] = jax.nn.sigmoid(z)


def attgnn_fused(x1, adj1, pool1, x2, adj2, pool2, prep, num_graphs, n_output):
    args = [x1, adj1, pool1, x2, adj2, pool2,
            prep["w1"], prep["asrc1"], prep["adst1"], prep["gatb1"],
            prep["w2"], prep["asrc2"], prep["adst2"], prep["gatb2"],
            prep["p1w"], prep["p1b"], prep["p2w"], prep["p2b"],
            prep["fc1_wa"], prep["fc1_wb"], prep["fc1_b"],
            prep["fc2_w"], prep["fc2_b"], prep["out_w"], prep["out_b"]]
    out = pl.pallas_call(
        _attgnn_kernel,
        out_shape=jax.ShapeDtypeStruct((num_graphs, _LANE), jnp.float32),
        grid=(1,),
        in_specs=[pl.BlockSpec(a.shape, lambda i: (0, 0)) for a in args],
        out_specs=pl.BlockSpec((num_graphs, _LANE), lambda i: (0, 0)),
        compiler_params=pltpu.CompilerParams(
            dimension_semantics=("arbitrary",),
            vmem_limit_bytes=_VMEM_LIMIT),
    )(*args)
    return out[:, :n_output]


# ----------------------------------------------------------------------------
# Host-side graph glue (torch_geometric edge_index / batch -> dense operands)
# ----------------------------------------------------------------------------
def gat_adjacency(edge_index, num_nodes):
    # 1 where edge j->i exists (or i == j, GATConv add_self_loops=True), 0 elsewhere.
    src, dst = edge_index
    adj = jnp.zeros((num_nodes, num_nodes), jnp.float32)
    adj = adj.at[dst, src].set(1.0)
    adj = jnp.maximum(adj, jnp.eye(num_nodes, dtype=jnp.float32))
    return adj.astype(jnp.bfloat16)


def mean_pool_matrix(batch, num_graphs):
    # gep(x, batch) as a (num_graphs, num_nodes) pooling matrix (rows average their graph).
    onehot = (batch[None, :] == jnp.arange(num_graphs)[:, None]).astype(jnp.float32)
    counts = jnp.maximum(onehot.sum(axis=1, keepdims=True), 1.0)
    return (onehot / counts).astype(jnp.bfloat16)


# ----------------------------------------------------------------------------
# One-time parameter preprocessing (hoisted out of the forward path)
# ----------------------------------------------------------------------------
def prepare_params(params, n_output=1):
    bf, f32 = jnp.bfloat16, jnp.float32
    d = params["pro1_fc1_w"].shape[1]
    assert 0 < n_output <= _LANE
    return {
        "w1": params["pro1_conv1_w"].astype(bf),
        "asrc1": params["pro1_conv1_att_src"].reshape(1, -1).astype(f32),
        "adst1": params["pro1_conv1_att_dst"].reshape(1, -1).astype(f32),
        "gatb1": params["pro1_conv1_b"].reshape(1, -1).astype(f32),
        "w2": params["pro2_conv1_w"].astype(bf),
        "asrc2": params["pro2_conv1_att_src"].reshape(1, -1).astype(f32),
        "adst2": params["pro2_conv1_att_dst"].reshape(1, -1).astype(f32),
        "gatb2": params["pro2_conv1_b"].reshape(1, -1).astype(f32),
        "p1w": params["pro1_fc1_w"].astype(bf),
        "p1b": params["pro1_fc1_b"].reshape(1, -1).astype(f32),
        "p2w": params["pro2_fc1_w"].astype(bf),
        "p2b": params["pro2_fc1_b"].reshape(1, -1).astype(f32),
        "fc1_wa": params["fc1_w"][:d].astype(bf),
        "fc1_wb": params["fc1_w"][d:].astype(bf),
        "fc1_b": params["fc1_b"].reshape(1, -1).astype(f32),
        "fc2_w": params["fc2_w"].astype(bf),
        "fc2_b": params["fc2_b"].reshape(1, -1).astype(f32),
        "out_w": jnp.pad(params["out_w"],
                         ((0, 0), (0, _LANE - n_output))).astype(bf),
        "out_b": jnp.pad(params["out_b"],
                         (0, _LANE - n_output)).reshape(1, -1).astype(f32),
    }


# ----------------------------------------------------------------------------
# AttGNN forward (eval mode: all dropouts = identity)
# ----------------------------------------------------------------------------
@functools.partial(jax.jit, static_argnames=("num_graphs", "n_output"))
def attgnn_forward(prep, pro1_x, pro1_edge_index, pro1_batch,
                   pro2_x, pro2_edge_index, pro2_batch, num_graphs, n_output=1):
    adj1 = gat_adjacency(pro1_edge_index, pro1_x.shape[0])
    adj2 = gat_adjacency(pro2_edge_index, pro2_x.shape[0])
    pool1 = mean_pool_matrix(pro1_batch, num_graphs)
    pool2 = mean_pool_matrix(pro2_batch, num_graphs)
    return attgnn_fused(pro1_x, adj1, pool1, pro2_x, adj2, pool2,
                        prep, num_graphs, n_output)


def init_params(key, num_features_pro=256, output_dim=128, n_output=1):
    hidden, heads = 8, 1
    gat_out = hidden * 16 * heads           # = 128, matches Linear(128, output_dim)
    ks = jax.random.split(key, 18)
    s = 0.05
    f, d = num_features_pro, output_dim
    return {
        "pro1_conv1_w": jax.random.normal(ks[0], (f, gat_out), jnp.float32) * s,
        "pro1_conv1_att_src": jax.random.normal(ks[1], (1, gat_out), jnp.float32) * s,
        "pro1_conv1_att_dst": jax.random.normal(ks[2], (1, gat_out), jnp.float32) * s,
        "pro1_conv1_b": jax.random.normal(ks[3], (gat_out,), jnp.float32) * s,
        "pro2_conv1_w": jax.random.normal(ks[4], (f, gat_out), jnp.float32) * s,
        "pro2_conv1_att_src": jax.random.normal(ks[5], (1, gat_out), jnp.float32) * s,
        "pro2_conv1_att_dst": jax.random.normal(ks[6], (1, gat_out), jnp.float32) * s,
        "pro2_conv1_b": jax.random.normal(ks[7], (gat_out,), jnp.float32) * s,
        "pro1_fc1_w": jax.random.normal(ks[8], (gat_out, d), jnp.float32) * s,
        "pro1_fc1_b": jax.random.normal(ks[9], (d,), jnp.float32) * s,
        "pro2_fc1_w": jax.random.normal(ks[10], (gat_out, d), jnp.float32) * s,
        "pro2_fc1_b": jax.random.normal(ks[11], (d,), jnp.float32) * s,
        "fc1_w": jax.random.normal(ks[12], (2 * d, 256), jnp.float32) * s,
        "fc1_b": jax.random.normal(ks[13], (256,), jnp.float32) * s,
        "fc2_w": jax.random.normal(ks[14], (256, 64), jnp.float32) * s,
        "fc2_b": jax.random.normal(ks[15], (64,), jnp.float32) * s,
        "out_w": jax.random.normal(ks[16], (64, n_output), jnp.float32) * s,
        "out_b": jax.random.normal(ks[17], (n_output,), jnp.float32) * s,
    }


def _ring_edges(n, offset=0):
    i = jnp.arange(n, dtype=jnp.int32)
    src = jnp.concatenate([i, (i + 1) % n]) + offset
    dst = jnp.concatenate([(i + 1) % n, i]) + offset
    return src, dst


if __name__ == "__main__":
    key = jax.random.PRNGKey(0)
    k_param, k_p1, k_p2 = jax.random.split(key, 3)

    NUM_FEATURES_PRO = 256   # small stand-in for the reference's 1024
    OUTPUT_DIM = 128
    N1 = 64                  # protein-1 nodes: 2 graphs x 32 nodes
    N2 = 64                  # protein-2 nodes: 2 graphs x 32 nodes
    NUM_GRAPHS = 2
    N_OUTPUT = 1

    params = init_params(k_param, NUM_FEATURES_PRO, OUTPUT_DIM, N_OUTPUT)
    prep = prepare_params(params, N_OUTPUT)          # one-time: casts / splits / padding

    pro1_x = jax.random.normal(k_p1, (N1, NUM_FEATURES_PRO), jnp.float32)
    pro2_x = jax.random.normal(k_p2, (N2, NUM_FEATURES_PRO), jnp.float32)

    # Protein 1: two undirected ring graphs of 32 nodes each.
    s1a, d1a = _ring_edges(32, offset=0)
    s1b, d1b = _ring_edges(32, offset=32)
    pro1_edge_index = jnp.stack([jnp.concatenate([s1a, s1b]),
                                 jnp.concatenate([d1a, d1b])])
    pro1_batch = jnp.concatenate([jnp.zeros((32,), jnp.int32),
                                  jnp.ones((32,), jnp.int32)])

    # Protein 2: two undirected ring graphs of 32 nodes each.
    s2a, d2a = _ring_edges(32, offset=0)
    s2b, d2b = _ring_edges(32, offset=32)
    pro2_edge_index = jnp.stack([jnp.concatenate([s2a, s2b]),
                                 jnp.concatenate([d2a, d2b])])
    pro2_batch = jnp.concatenate([jnp.zeros((32,), jnp.int32),
                                  jnp.ones((32,), jnp.int32)])

    out = attgnn_forward(prep, pro1_x, pro1_edge_index, pro1_batch,
                         pro2_x, pro2_edge_index, pro2_batch,
                         NUM_GRAPHS, N_OUTPUT)
    out = jax.block_until_ready(out)
    assert out.shape == (NUM_GRAPHS, N_OUTPUT) and out.dtype == jnp.float32
    assert bool(jnp.all(jnp.isfinite(out)))
    assert bool(jnp.all((out >= 0.0) & (out <= 1.0)))
    print("KERNEL_OK")
</pallas_src>

<mosaic_0001>
module attributes {stable_mosaic.version = 11 : i64} {
  func.func @_attgnn_kernel(%arg0: i32, %arg1: memref<64x256xf32, #tpu.memory_space<vmem>>, %arg2: memref<64x64xbf16, #tpu.memory_space<vmem>>, %arg3: memref<2x64xbf16, #tpu.memory_space<vmem>>, %arg4: memref<64x256xf32, #tpu.memory_space<vmem>>, %arg5: memref<64x64xbf16, #tpu.memory_space<vmem>>, %arg6: memref<2x64xbf16, #tpu.memory_space<vmem>>, %arg7: memref<256x128xbf16, #tpu.memory_space<vmem>>, %arg8: memref<1x128xf32, #tpu.memory_space<vmem>>, %arg9: memref<1x128xf32, #tpu.memory_space<vmem>>, %arg10: memref<1x128xf32, #tpu.memory_space<vmem>>, %arg11: memref<256x128xbf16, #tpu.memory_space<vmem>>, %arg12: memref<1x128xf32, #tpu.memory_space<vmem>>, %arg13: memref<1x128xf32, #tpu.memory_space<vmem>>, %arg14: memref<1x128xf32, #tpu.memory_space<vmem>>, %arg15: memref<128x128xbf16, #tpu.memory_space<vmem>>, %arg16: memref<1x128xf32, #tpu.memory_space<vmem>>, %arg17: memref<128x128xbf16, #tpu.memory_space<vmem>>, %arg18: memref<1x128xf32, #tpu.memory_space<vmem>>, %arg19: memref<128x256xbf16, #tpu.memory_space<vmem>>, %arg20: memref<128x256xbf16, #tpu.memory_space<vmem>>, %arg21: memref<1x256xf32, #tpu.memory_space<vmem>>, %arg22: memref<256x64xbf16, #tpu.memory_space<vmem>>, %arg23: memref<1x64xf32, #tpu.memory_space<vmem>>, %arg24: memref<64x128xbf16, #tpu.memory_space<vmem>>, %arg25: memref<1x128xf32, #tpu.memory_space<vmem>>, %arg26: memref<2x128xf32, #tpu.memory_space<vmem>>) attributes {dimension_semantics = [#tpu.dimension_semantics<arbitrary>], iteration_bounds = array<i64: 1>, scalar_prefetch = 0 : i64, scratch_operands = 0 : i64, tpu.core_type = #tpu.core_type<tc>, window_params = [{pipeline_mode = #tpu.pipeline_mode<synchronous>, transform_indices = @transform_0, window_bounds = array<i64: 64, 256>}, {pipeline_mode = #tpu.pipeline_mode<synchronous>, transform_indices = @transform_1, window_bounds = array<i64: 64, 64>}, {pipeline_mode = #tpu.pipeline_mode<synchronous>, transform_indices = @transform_2, window_bounds = array<i64: 2, 64>}, {pipeline_mode = #tpu.pipeline_mode<synchronous>, transform_indices = @transform_3, window_bounds = array<i64: 64, 256>}, {pipeline_mode = #tpu.pipeline_mode<synchronous>, transform_indices = @transform_4, window_bounds = array<i64: 64, 64>}, {pipeline_mode = #tpu.pipeline_mode<synchronous>, transform_indices = @transform_5, window_bounds = array<i64: 2, 64>}, {pipeline_mode = #tpu.pipeline_mode<synchronous>, transform_indices = @transform_6, window_bounds = array<i64: 256, 128>}, {pipeline_mode = #tpu.pipeline_mode<synchronous>, transform_indices = @transform_7, window_bounds = array<i64: 1, 128>}, {pipeline_mode = #tpu.pipeline_mode<synchronous>, transform_indices = @transform_8, window_bounds = array<i64: 1, 128>}, {pipeline_mode = #tpu.pipeline_mode<synchronous>, transform_indices = @transform_9, window_bounds = array<i64: 1, 128>}, {pipeline_mode = #tpu.pipeline_mode<synchronous>, transform_indices = @transform_10, window_bounds = array<i64: 256, 128>}, {pipeline_mode = #tpu.pipeline_mode<synchronous>, transform_indices = @transform_11, window_bounds = array<i64: 1, 128>}, {pipeline_mode = #tpu.pipeline_mode<synchronous>, transform_indices = @transform_12, window_bounds = array<i64: 1, 128>}, {pipeline_mode = #tpu.pipeline_mode<synchronous>, transform_indices = @transform_13, window_bounds = array<i64: 1, 128>}, {pipeline_mode = #tpu.pipeline_mode<synchronous>, transform_indices = @transform_14, window_bounds = array<i64: 128, 128>}, {pipeline_mode = #tpu.pipeline_mode<synchronous>, transform_indices = @transform_15, window_bounds = array<i64: 1, 128>}, {pipeline_mode = #tpu.pipeline_mode<synchronous>, transform_indices = @transform_16, window_bounds = array<i64: 128, 128>}, {pipeline_mode = #tpu.pipeline_mode<synchronous>, transform_indices = @transform_17, window_bounds = array<i64: 1, 128>}, {pipeline_mode = #tpu.pipeline_mode<synchronous>, transform_indices = @transform_18, window_bounds = array<i64: 128, 256>}, {pipeline_mode = #tpu.pipeline_mode<synchronous>, transform_indices = @transform_19, window_bounds = array<i64: 128, 256>}, {pipeline_mode = #tpu.pipeline_mode<synchronous>, transform_indices = @transform_20, window_bounds = array<i64: 1, 256>}, {pipeline_mode = #tpu.pipeline_mode<synchronous>, transform_indices = @transform_21, window_bounds = array<i64: 256, 64>}, {pipeline_mode = #tpu.pipeline_mode<synchronous>, transform_indices = @transform_22, window_bounds = array<i64: 1, 64>}, {pipeline_mode = #tpu.pipeline_mode<synchronous>, transform_indices = @transform_23, window_bounds = array<i64: 64, 128>}, {pipeline_mode = #tpu.pipeline_mode<synchronous>, transform_indices = @transform_24, window_bounds = array<i64: 1, 128>}, {pipeline_mode = #tpu.pipeline_mode<synchronous>, transform_indices = @transform_25, window_bounds = array<i64: 2, 128>}]} {
    %c0 = arith.constant 0 : index
    %c0_0 = arith.constant 0 : index
    %0 = vector.load %arg1[%c0, %c0_0] : memref<64x256xf32, #tpu.memory_space<vmem>>, vector<64x256xf32>
    %c0_1 = arith.constant 0 : index
    %c0_2 = arith.constant 0 : index
    %1 = vector.load %arg2[%c0_1, %c0_2] : memref<64x64xbf16, #tpu.memory_space<vmem>>, vector<64x64xbf16>
    %c0_3 = arith.constant 0 : index
    %c0_4 = arith.constant 0 : index
    %2 = vector.load %arg7[%c0_3, %c0_4] : memref<256x128xbf16, #tpu.memory_space<vmem>>, vector<256x128xbf16>
    %c0_5 = arith.constant 0 : index
    %c0_6 = arith.constant 0 : index
    %3 = vector.load %arg8[%c0_5, %c0_6] : memref<1x128xf32, #tpu.memory_space<vmem>>, vector<1x128xf32>
    %c0_7 = arith.constant 0 : index
    %c0_8 = arith.constant 0 : index
    %4 = vector.load %arg9[%c0_7, %c0_8] : memref<1x128xf32, #tpu.memory_space<vmem>>, vector<1x128xf32>
    %c0_9 = arith.constant 0 : index
    %c0_10 = arith.constant 0 : index
    %5 = vector.load %arg10[%c0_9, %c0_10] : memref<1x128xf32, #tpu.memory_space<vmem>>, vector<1x128xf32>
    %6 = arith.truncf %0 : vector<64x256xf32> to vector<64x256xbf16>
    %cst = arith.constant dense<0.000000e+00> : vector<64x128xf32>
    %7 = tpu.matmul %6, %2, %cst {dimension_numbers = #tpu.dot_dimension_numbers<[1], [0], [0], [1], [0, 0, 1, 1], [], []>} : vector<64x256xbf16>, vector<256x128xbf16>, vector<64x128xf32> -> vector<64x128xf32>
    %8 = arith.truncf %7 : vector<64x128xf32> to vector<64x128xbf16>
    %9 = vector.broadcast %4 : vector<1x128xf32> to vector<64x128xf32>
    %10 = arith.mulf %7, %9 : vector<64x128xf32>
    %cst_11 = arith.constant dense<0.000000e+00> : vector<64xf32>
    %11 = vector.multi_reduction <add>, %10, %cst_11 [1] : vector<64x128xf32> to vector<64xf32>
    %12 = vector.shape_cast %11 : vector<64xf32> to vector<64x1xf32>
    %13 = arith.truncf %3 : vector<1x128xf32> to vector<1x128xbf16>
    %cst_12 = arith.constant dense<0.000000e+00> : vector<1x64xf32>
    %14 = tpu.matmul %13, %8, %cst_12 {dimension_numbers = #tpu.dot_dimension_numbers<[1], [1], [0], [0], [0, 0, 1, 0], [], []>} : vector<1x128xbf16>, vector<64x128xbf16>, vector<1x64xf32> -> vector<1x64xf32>
    %15 = vector.broadcast %12 : vector<64x1xf32> to vector<64x64xf32>
    %16 = vector.broadcast %14 : vector<1x64xf32> to vector<64x64xf32>
    %17 = arith.addf %15, %16 : vector<64x64xf32>
    %cst_13 = arith.constant 0.000000e+00 : f32
    %18 = vector.broadcast %cst_13 : f32 to vector<64x64xf32>
    %19 = arith.cmpf ogt, %17, %18 : vector<64x64xf32>
    %cst_14 = arith.constant 2.000000e-01 : f32
    %20 = vector.broadcast %cst_14 : f32 to vector<64x64xf32>
    %21 = arith.mulf %20, %17 : vector<64x64xf32>
    %22 = arith.select %19, %17, %21 : vector<64x64xi1>, vector<64x64xf32>
    %cst_15 = arith.constant 0.000000e+00 : bf16
    %23 = vector.broadcast %cst_15 : bf16 to vector<64x64xbf16>
    %24 = arith.cmpf ogt, %1, %23 : vector<64x64xbf16>
    %cst_16 = arith.constant -1.000000e+30 : f32
    %25 = vector.broadcast %cst_16 : f32 to vector<64x64xf32>
    %26 = arith.select %24, %22, %25 : vector<64x64xi1>, vector<64x64xf32>
    %cst_17 = arith.constant dense<0xFF800000> : vector<64xf32>
    %27 = vector.multi_reduction <maximumf>, %26, %cst_17 [1] : vector<64x64xf32> to vector<64xf32>
    %28 = vector.shape_cast %27 : vector<64xf32> to vector<64x1xf32>
    %29 = vector.broadcast %28 : vector<64x1xf32> to vector<64x64xf32>
    %30 = arith.subf %26, %29 : vector<64x64xf32>
    %31 = math.exp %30 : vector<64x64xf32>
    %cst_18 = arith.constant dense<0.000000e+00> : vector<64xf32>
    %32 = vector.multi_reduction <add>, %31, %cst_18 [1] : vector<64x64xf32> to vector<64xf32>
    %33 = vector.shape_cast %32 : vector<64xf32> to vector<64x1xf32>
    %34 = vector.broadcast %33 : vector<64x1xf32> to vector<64x64xf32>
    %35 = arith.divf %31, %34 : vector<64x64xf32>
    %36 = arith.truncf %35 : vector<64x64xf32> to vector<64x64xbf16>
    %cst_19 = arith.constant dense<0.000000e+00> : vector<64x128xf32>
    %37 = tpu.matmul %36, %8, %cst_19 {dimension_numbers = #tpu.dot_dimension_numbers<[1], [0], [0], [1], [0, 0, 1, 1], [], []>} : vector<64x64xbf16>, vector<64x128xbf16>, vector<64x128xf32> -> vector<64x128xf32>
    %38 = vector.broadcast %5 : vector<1x128xf32> to vector<64x128xf32>
    %39 = arith.addf %37, %38 : vector<64x128xf32>
    %cst_20 = arith.constant 0.000000e+00 : f32
    %40 = vector.broadcast %cst_20 : f32 to vector<64x128xf32>
    %41 = arith.cmpf ogt, %39, %40 : vector<64x128xf32>
    %cst_21 = arith.constant 0.00999999977 : f32
    %42 = vector.broadcast %cst_21 : f32 to vector<64x128xf32>
    %43 = arith.mulf %42, %39 : vector<64x128xf32>
    %44 = arith.select %41, %39, %43 : vector<64x128xi1>, vector<64x128xf32>
    %c0_22 = arith.constant 0 : index
    %c0_23 = arith.constant 0 : index
    %45 = vector.load %arg3[%c0_22, %c0_23] : memref<2x64xbf16, #tpu.memory_space<vmem>>, vector<2x64xbf16>
    %46 = arith.truncf %44 : vector<64x128xf32> to vector<64x128xbf16>
    %cst_24 = arith.constant dense<0.000000e+00> : vector<2x128xf32>
    %47 = tpu.matmul %45, %46, %cst_24 {dimension_numbers = #tpu.dot_dimension_numbers<[1], [0], [0], [1], [0, 0, 1, 1], [], []>} : vector<2x64xbf16>, vector<64x128xbf16>, vector<2x128xf32> -> vector<2x128xf32>
    %48 = arith.truncf %47 : vector<2x128xf32> to vector<2x128xbf16>
    %c0_25 = arith.constant 0 : index
    %c0_26 = arith.constant 0 : index
    %49 = vector.load %arg15[%c0_25, %c0_26] : memref<128x128xbf16, #tpu.memory_space<vmem>>, vector<128x128xbf16>
    %cst_27 = arith.constant dense<0.000000e+00> : vector<2x128xf32>
    %50 = tpu.matmul %48, %49, %cst_27 {dimension_numbers = #tpu.dot_dimension_numbers<[1], [0], [0], [1], [0, 0, 1, 1], [], []>} : vector<2x128xbf16>, vector<128x128xbf16>, vector<2x128xf32> -> vector<2x128xf32>
    %c0_28 = arith.constant 0 : index
    %c0_29 = arith.constant 0 : index
    %51 = vector.load %arg16[%c0_28, %c0_29] : memref<1x128xf32, #tpu.memory_space<vmem>>, vector<1x128xf32>
    %52 = vector.broadcast %51 : vector<1x128xf32> to vector<2x128xf32>
    %53 = arith.addf %50, %52 : vector<2x128xf32>
    %cst_30 = arith.constant 0.000000e+00 : f32
    %54 = vector.broadcast %cst_30 : f32 to vector<2x128xf32>
    %55 = arith.cmpf ogt, %53, %54 : vector<2x128xf32>
    %cst_31 = arith.constant 0.00999999977 : f32
    %56 = vector.broadcast %cst_31 : f32 to vector<2x128xf32>
    %57 = arith.mulf %56, %53 : vector<2x128xf32>
    %58 = arith.select %55, %53, %57 : vector<2x128xi1>, vector<2x128xf32>
    %c0_32 = arith.constant 0 : index
    %c0_33 = arith.constant 0 : index
    %59 = vector.load %arg4[%c0_32, %c0_33] : memref<64x256xf32, #tpu.memory_space<vmem>>, vector<64x256xf32>
    %c0_34 = arith.constant 0 : index
    %c0_35 = arith.constant 0 : index
    %60 = vector.load %arg5[%c0_34, %c0_35] : memref<64x64xbf16, #tpu.memory_space<vmem>>, vector<64x64xbf16>
    %c0_36 = arith.constant 0 : index
    %c0_37 = arith.constant 0 : index
    %61 = vector.load %arg11[%c0_36, %c0_37] : memref<256x128xbf16, #tpu.memory_space<vmem>>, vector<256x128xbf16>
    %c0_38 = arith.constant 0 : index
    %c0_39 = arith.constant 0 : index
    %62 = vector.load %arg12[%c0_38, %c0_39] : memref<1x128xf32, #tpu.memory_space<vmem>>, vector<1x128xf32>
    %c0_40 = arith.constant 0 : index
    %c0_41 = arith.constant 0 : index
    %63 = vector.load %arg13[%c0_40, %c0_41] : memref<1x128xf32, #tpu.memory_space<vmem>>, vector<1x128xf32>
    %c0_42 = arith.constant 0 : index
    %c0_43 = arith.constant 0 : index
    %64 = vector.load %arg14[%c0_42, %c0_43] : memref<1x128xf32, #tpu.memory_space<vmem>>, vector<1x128xf32>
    %65 = arith.truncf %59 : vector<64x256xf32> to vector<64x256xbf16>
    %cst_44 = arith.constant dense<0.000000e+00> : vector<64x128xf32>
    %66 = tpu.matmul %65, %61, %cst_44 {dimension_numbers = #tpu.dot_dimension_numbers<[1], [0], [0], [1], [0, 0, 1, 1], [], []>} : vector<64x256xbf16>, vector<256x128xbf16>, vector<64x128xf32> -> vector<64x128xf32>
    %67 = arith.truncf %66 : vector<64x128xf32> to vector<64x128xbf16>
    %68 = vector.broadcast %63 : vector<1x128xf32> to vector<64x128xf32>
    %69 = arith.mulf %66, %68 : vector<64x128xf32>
    %cst_45 = arith.constant dense<0.000000e+00> : vector<64xf32>
    %70 = vector.multi_reduction <add>, %69, %cst_45 [1] : vector<64x128xf32> to vector<64xf32>
    %71 = vector.shape_cast %70 : vector<64xf32> to vector<64x1xf32>
    %72 = arith.truncf %62 : vector<1x128xf32> to vector<1x128xbf16>
    %cst_46 = arith.constant dense<0.000000e+00> : vector<1x64xf32>
    %73 = tpu.matmul %72, %67, %cst_46 {dimension_numbers = #tpu.dot_dimension_numbers<[1], [1], [0], [0], [0, 0, 1, 0], [], []>} : vector<1x128xbf16>, vector<64x128xbf16>, vector<1x64xf32> -> vector<1x64xf32>
    %74 = vector.broadcast %71 : vector<64x1xf32> to vector<64x64xf32>
    %75 = vector.broadcast %73 : vector<1x64xf32> to vector<64x64xf32>
    %76 = arith.addf %74, %75 : vector<64x64xf32>
    %cst_47 = arith.constant 0.000000e+00 : f32
    %77 = vector.broadcast %cst_47 : f32 to vector<64x64xf32>
    %78 = arith.cmpf ogt, %76, %77 : vector<64x64xf32>
    %cst_48 = arith.constant 2.000000e-01 : f32
    %79 = vector.broadcast %cst_48 : f32 to vector<64x64xf32>
    %80 = arith.mulf %79, %76 : vector<64x64xf32>
    %81 = arith.select %78, %76, %80 : vector<64x64xi1>, vector<64x64xf32>
    %cst_49 = arith.constant 0.000000e+00 : bf16
    %82 = vector.broadcast %cst_49 : bf16 to vector<64x64xbf16>
    %83 = arith.cmpf ogt, %60, %82 : vector<64x64xbf16>
    %cst_50 = arith.constant -1.000000e+30 : f32
    %84 = vector.broadcast %cst_50 : f32 to vector<64x64xf32>
    %85 = arith.select %83, %81, %84 : vector<64x64xi1>, vector<64x64xf32>
    %cst_51 = arith.constant dense<0xFF800000> : vector<64xf32>
    %86 = vector.multi_reduction <maximumf>, %85, %cst_51 [1] : vector<64x64xf32> to vector<64xf32>
    %87 = vector.shape_cast %86 : vector<64xf32> to vector<64x1xf32>
    %88 = vector.broadcast %87 : vector<64x1xf32> to vector<64x64xf32>
    %89 = arith.subf %85, %88 : vector<64x64xf32>
    %90 = math.exp %89 : vector<64x64xf32>
    %cst_52 = arith.constant dense<0.000000e+00> : vector<64xf32>
    %91 = vector.multi_reduction <add>, %90, %cst_52 [1] : vector<64x64xf32> to vector<64xf32>
    %92 = vector.shape_cast %91 : vector<64xf32> to vector<64x1xf32>
    %93 = vector.broadcast %92 : vector<64x1xf32> to vector<64x64xf32>
    %94 = arith.divf %90, %93 : vector<64x64xf32>
    %95 = arith.truncf %94 : vector<64x64xf32> to vector<64x64xbf16>
    %cst_53 = arith.constant dense<0.000000e+00> : vector<64x128xf32>
    %96 = tpu.matmul %95, %67, %cst_53 {dimension_numbers = #tpu.dot_dimension_numbers<[1], [0], [0], [1], [0, 0, 1, 1], [], []>} : vector<64x64xbf16>, vector<64x128xbf16>, vector<64x128xf32> -> vector<64x128xf32>
    %97 = vector.broadcast %64 : vector<1x128xf32> to vector<64x128xf32>
    %98 = arith.addf %96, %97 : vector<64x128xf32>
    %99 = arith.truncf %98 : vector<64x128xf32> to vector<64x128xbf16>
    %c0_54 = arith.constant 0 : index
    %c0_55 = arith.constant 0 : index
    %100 = vector.load %arg17[%c0_54, %c0_55] : memref<128x128xbf16, #tpu.memory_space<vmem>>, vector<128x128xbf16>
    %cst_56 = arith.constant dense<0.000000e+00> : vector<64x128xf32>
    %101 = tpu.matmul %99, %100, %cst_56 {dimension_numbers = #tpu.dot_dimension_numbers<[1], [0], [0], [1], [0, 0, 1, 1], [], []>} : vector<64x128xbf16>, vector<128x128xbf16>, vector<64x128xf32> -> vector<64x128xf32>
    %c0_57 = arith.constant 0 : index
    %c0_58 = arith.constant 0 : index
    %102 = vector.load %arg18[%c0_57, %c0_58] : memref<1x128xf32, #tpu.memory_space<vmem>>, vector<1x128xf32>
    %103 = vector.broadcast %102 : vector<1x128xf32> to vector<64x128xf32>
    %104 = arith.addf %101, %103 : vector<64x128xf32>
    %cst_59 = arith.constant 0.000000e+00 : f32
    %105 = vector.broadcast %cst_59 : f32 to vector<64x128xf32>
    %106 = arith.cmpf ogt, %104, %105 : vector<64x128xf32>
    %cst_60 = arith.constant 0.00999999977 : f32
    %107 = vector.broadcast %cst_60 : f32 to vector<64x128xf32>
    %108 = arith.mulf %107, %104 : vector<64x128xf32>
    %109 = arith.select %106, %104, %108 : vector<64x128xi1>, vector<64x128xf32>
    %c0_61 = arith.constant 0 : index
    %c0_62 = arith.constant 0 : index
    %110 = vector.load %arg6[%c0_61, %c0_62] : memref<2x64xbf16, #tpu.memory_space<vmem>>, vector<2x64xbf16>
    %111 = arith.truncf %109 : vector<64x128xf32> to vector<64x128xbf16>
    %cst_63 = arith.constant dense<0.000000e+00> : vector<2x128xf32>
    %112 = tpu.matmul %110, %111, %cst_63 {dimension_numbers = #tpu.dot_dimension_numbers<[1], [0], [0], [1], [0, 0, 1, 1], [], []>} : vector<2x64xbf16>, vector<64x128xbf16>, vector<2x128xf32> -> vector<2x128xf32>
    %cst_64 = arith.constant 0.000000e+00 : f32
    %113 = vector.broadcast %cst_64 : f32 to vector<2x128xf32>
    %114 = arith.cmpf ogt, %112, %113 : vector<2x128xf32>
    %cst_65 = arith.constant 0.00999999977 : f32
    %115 = vector.broadcast %cst_65 : f32 to vector<2x128xf32>
    %116 = arith.mulf %115, %112 : vector<2x128xf32>
    %117 = arith.select %114, %112, %116 : vector<2x128xi1>, vector<2x128xf32>
    %118 = arith.truncf %58 : vector<2x128xf32> to vector<2x128xbf16>
    %c0_66 = arith.constant 0 : index
    %c0_67 = arith.constant 0 : index
    %119 = vector.load %arg19[%c0_66, %c0_67] : memref<128x256xbf16, #tpu.memory_space<vmem>>, vector<128x256xbf16>
    %cst_68 = arith.constant dense<0.000000e+00> : vector<2x256xf32>
    %120 = tpu.matmul %118, %119, %cst_68 {dimension_numbers = #tpu.dot_dimension_numbers<[1], [0], [0], [1], [0, 0, 1, 1], [], []>} : vector<2x128xbf16>, vector<128x256xbf16>, vector<2x256xf32> -> vector<2x256xf32>
    %121 = arith.truncf %117 : vector<2x128xf32> to vector<2x128xbf16>
    %c0_69 = arith.constant 0 : index
    %c0_70 = arith.constant 0 : index
    %122 = vector.load %arg20[%c0_69, %c0_70] : memref<128x256xbf16, #tpu.memory_space<vmem>>, vector<128x256xbf16>
    %cst_71 = arith.constant dense<0.000000e+00> : vector<2x256xf32>
    %123 = tpu.matmul %121, %122, %cst_71 {dimension_numbers = #tpu.dot_dimension_numbers<[1], [0], [0], [1], [0, 0, 1, 1], [], []>} : vector<2x128xbf16>, vector<128x256xbf16>, vector<2x256xf32> -> vector<2x256xf32>
    %124 = arith.addf %120, %123 : vector<2x256xf32>
    %c0_72 = arith.constant 0 : index
    %c0_73 = arith.constant 0 : index
    %125 = vector.load %arg21[%c0_72, %c0_73] : memref<1x256xf32, #tpu.memory_space<vmem>>, vector<1x256xf32>
    %126 = vector.broadcast %125 : vector<1x256xf32> to vector<2x256xf32>
    %127 = arith.addf %124, %126 : vector<2x256xf32>
    %cst_74 = arith.constant 0.000000e+00 : f32
    %128 = vector.broadcast %cst_74 : f32 to vector<2x256xf32>
    %129 = arith.cmpf ogt, %127, %128 : vector<2x256xf32>
    %cst_75 = arith.constant 0.00999999977 : f32
    %130 = vector.broadcast %cst_75 : f32 to vector<2x256xf32>
    %131 = arith.mulf %130, %127 : vector<2x256xf32>
    %132 = arith.select %129, %127, %131 : vector<2x256xi1>, vector<2x256xf32>
    %133 = arith.truncf %132 : vector<2x256xf32> to vector<2x256xbf16>
    %c0_76 = arith.constant 0 : index
    %c0_77 = arith.constant 0 : index
    %134 = vector.load %arg22[%c0_76, %c0_77] : memref<256x64xbf16, #tpu.memory_space<vmem>>, vector<256x64xbf16>
    %cst_78 = arith.constant dense<0.000000e+00> : vector<2x64xf32>
    %135 = tpu.matmul %133, %134, %cst_78 {dimension_numbers = #tpu.dot_dimension_numbers<[1], [0], [0], [1], [0, 0, 1, 1], [], []>} : vector<2x256xbf16>, vector<256x64xbf16>, vector<2x64xf32> -> vector<2x64xf32>
    %c0_79 = arith.constant 0 : index
    %c0_80 = arith.constant 0 : index
    %136 = vector.load %arg23[%c0_79, %c0_80] : memref<1x64xf32, #tpu.memory_space<vmem>>, vector<1x64xf32>
    %137 = vector.broadcast %136 : vector<1x64xf32> to vector<2x64xf32>
    %138 = arith.addf %135, %137 : vector<2x64xf32>
    %cst_81 = arith.constant 0.000000e+00 : f32
    %139 = vector.broadcast %cst_81 : f32 to vector<2x64xf32>
    %140 = arith.cmpf ogt, %138, %139 : vector<2x64xf32>
    %cst_82 = arith.constant 0.00999999977 : f32
    %141 = vector.broadcast %cst_82 : f32 to vector<2x64xf32>
    %142 = arith.mulf %141, %138 : vector<2x64xf32>
    %143 = arith.select %140, %138, %142 : vector<2x64xi1>, vector<2x64xf32>
    %144 = arith.truncf %143 : vector<2x64xf32> to vector<2x64xbf16>
    %c0_83 = arith.constant 0 : index
    %c0_84 = arith.constant 0 : index
    %145 = vector.load %arg24[%c0_83, %c0_84] : memref<64x128xbf16, #tpu.memory_space<vmem>>, vector<64x128xbf16>
    %cst_85 = arith.constant dense<0.000000e+00> : vector<2x128xf32>
    %146 = tpu.matmul %144, %145, %cst_85 {dimension_numbers = #tpu.dot_dimension_numbers<[1], [0], [0], [1], [0, 0, 1, 1], [], []>} : vector<2x64xbf16>, vector<64x128xbf16>, vector<2x128xf32> -> vector<2x128xf32>
    %c0_86 = arith.constant 0 : index
    %c0_87 = arith.constant 0 : index
    %147 = vector.load %arg25[%c0_86, %c0_87] : memref<1x128xf32, #tpu.memory_space<vmem>>, vector<1x128xf32>
    %148 = vector.broadcast %147 : vector<1x128xf32> to vector<2x128xf32>
    %149 = arith.addf %146, %148 : vector<2x128xf32>
    %150 = arith.negf %149 : vector<2x128xf32>
    %151 = math.exp %150 : vector<2x128xf32>
    %cst_88 = arith.constant 1.000000e+00 : f32
    %152 = vector.broadcast %cst_88 : f32 to vector<2x128xf32>
    %153 = arith.addf %152, %151 : vector<2x128xf32>
    %154 = arith.divf %152, %153 : vector<2x128xf32>
    %c0_89 = arith.constant 0 : index
    %c0_90 = arith.constant 0 : index
    %155 = vector.load %arg26[%c0_89, %c0_90] : memref<2x128xf32, #tpu.memory_space<vmem>>, vector<2x128xf32>
    tpu.vector_store %arg26[%c0_89, %c0_90], %154 {strides = array<i32>} : memref<2x128xf32, #tpu.memory_space<vmem>>, vector<2x128xf32>,
    return
  }
  func.func @transform_0(%arg0: i32) -> (i32, i32) {
    %c0_i32 = arith.constant 0 : i32
    %c0_i32_0 = arith.constant 0 : i32
    %c0_i32_1 = arith.constant 0 : i32
    return %c0_i32, %c0_i32_0 : i32, i32
  }
  func.func @transform_1(%arg0: i32) -> (i32, i32) {
    %c0_i32 = arith.constant 0 : i32
    %c0_i32_0 = arith.constant 0 : i32
    %c0_i32_1 = arith.constant 0 : i32
    return %c0_i32, %c0_i32_0 : i32, i32
  }
  func.func @transform_2(%arg0: i32) -> (i32, i32) {
    %c0_i32 = arith.constant 0 : i32
    %c0_i32_0 = arith.constant 0 : i32
    %c0_i32_1 = arith.constant 0 : i32
    return %c0_i32, %c0_i32_0 : i32, i32
  }
  func.func @transform_3(%arg0: i32) -> (i32, i32) {
    %c0_i32 = arith.constant 0 : i32
    %c0_i32_0 = arith.constant 0 : i32
    %c0_i32_1 = arith.constant 0 : i32
    return %c0_i32, %c0_i32_0 : i32, i32
  }
  func.func @transform_4(%arg0: i32) -> (i32, i32) {
    %c0_i32 = arith.constant 0 : i32
    %c0_i32_0 = arith.constant 0 : i32
    %c0_i32_1 = arith.constant 0 : i32
    return %c0_i32, %c0_i32_0 : i32, i32
  }
  func.func @transform_5(%arg0: i32) -> (i32, i32) {
    %c0_i32 = arith.constant 0 : i32
    %c0_i32_0 = arith.constant 0 : i32
    %c0_i32_1 = arith.constant 0 : i32
    return %c0_i32, %c0_i32_0 : i32, i32
  }
  func.func @transform_6(%arg0: i32) -> (i32, i32) {
    %c0_i32 = arith.constant 0 : i32
    %c0_i32_0 = arith.constant 0 : i32
    %c0_i32_1 = arith.constant 0 : i32
    return %c0_i32, %c0_i32_0 : i32, i32
  }
  func.func @transform_7(%arg0: i32) -> (i32, i32) {
    %c0_i32 = arith.constant 0 : i32
    %c0_i32_0 = arith.constant 0 : i32
    %c0_i32_1 = arith.constant 0 : i32
    return %c0_i32, %c0_i32_0 : i32, i32
  }
  func.func @transform_8(%arg0: i32) -> (i32, i32) {
    %c0_i32 = arith.constant 0 : i32
    %c0_i32_0 = arith.constant 0 : i32
    %c0_i32_1 = arith.constant 0 : i32
    return %c0_i32, %c0_i32_0 : i32, i32
  }
  func.func @transform_9(%arg0: i32) -> (i32, i32) {
    %c0_i32 = arith.constant 0 : i32
    %c0_i32_0 = arith.constant 0 : i32
    %c0_i32_1 = arith.constant 0 : i32
    return %c0_i32, %c0_i32_0 : i32, i32
  }
  func.func @transform_10(%arg0: i32) -> (i32, i32) {
    %c0_i32 = arith.constant 0 : i32
    %c0_i32_0 = arith.constant 0 : i32
    %c0_i32_1 = arith.constant 0 : i32
    return %c0_i32, %c0_i32_0 : i32, i32
  }
  func.func @transform_11(%arg0: i32) -> (i32, i32) {
    %c0_i32 = arith.constant 0 : i32
    %c0_i32_0 = arith.constant 0 : i32
    %c0_i32_1 = arith.constant 0 : i32
    return %c0_i32, %c0_i32_0 : i32, i32
  }
  func.func @transform_12(%arg0: i32) -> (i32, i32) {
    %c0_i32 = arith.constant 0 : i32
    %c0_i32_0 = arith.constant 0 : i32
    %c0_i32_1 = arith.constant 0 : i32
    return %c0_i32, %c0_i32_0 : i32, i32
  }
  func.func @transform_13(%arg0: i32) -> (i32, i32) {
    %c0_i32 = arith.constant 0 : i32
    %c0_i32_0 = arith.constant 0 : i32
    %c0_i32_1 = arith.constant 0 : i32
    return %c0_i32, %c0_i32_0 : i32, i32
  }
  func.func @transform_14(%arg0: i32) -> (i32, i32) {
    %c0_i32 = arith.constant 0 : i32
    %c0_i32_0 = arith.constant 0 : i32
    %c0_i32_1 = arith.constant 0 : i32
    return %c0_i32, %c0_i32_0 : i32, i32
  }
  func.func @transform_15(%arg0: i32) -> (i32, i32) {
    %c0_i32 = arith.constant 0 : i32
    %c0_i32_0 = arith.constant 0 : i32
    %c0_i32_1 = arith.constant 0 : i32
    return %c0_i32, %c0_i32_0 : i32, i32
  }
  func.func @transform_16(%arg0: i32) -> (i32, i32) {
    %c0_i32 = arith.constant 0 : i32
    %c0_i32_0 = arith.constant 0 : i32
    %c0_i32_1 = arith.constant 0 : i32
    return %c0_i32, %c0_i32_0 : i32, i32
  }
  func.func @transform_17(%arg0: i32) -> (i32, i32) {
    %c0_i32 = arith.constant 0 : i32
    %c0_i32_0 = arith.constant 0 : i32
    %c0_i32_1 = arith.constant 0 : i32
    return %c0_i32, %c0_i32_0 : i32, i32
  }
  func.func @transform_18(%arg0: i32) -> (i32, i32) {
    %c0_i32 = arith.constant 0 : i32
    %c0_i32_0 = arith.constant 0 : i32
    %c0_i32_1 = arith.constant 0 : i32
    return %c0_i32, %c0_i32_0 : i32, i32
  }
  func.func @transform_19(%arg0: i32) -> (i32, i32) {
    %c0_i32 = arith.constant 0 : i32
    %c0_i32_0 = arith.constant 0 : i32
    %c0_i32_1 = arith.constant 0 : i32
    return %c0_i32, %c0_i32_0 : i32, i32
  }
  func.func @transform_20(%arg0: i32) -> (i32, i32) {
    %c0_i32 = arith.constant 0 : i32
    %c0_i32_0 = arith.constant 0 : i32
    %c0_i32_1 = arith.constant 0 : i32
    return %c0_i32, %c0_i32_0 : i32, i32
  }
  func.func @transform_21(%arg0: i32) -> (i32, i32) {
    %c0_i32 = arith.constant 0 : i32
    %c0_i32_0 = arith.constant 0 : i32
    %c0_i32_1 = arith.constant 0 : i32
    return %c0_i32, %c0_i32_0 : i32, i32
  }
  func.func @transform_22(%arg0: i32) -> (i32, i32) {
    %c0_i32 = arith.constant 0 : i32
    %c0_i32_0 = arith.constant 0 : i32
    %c0_i32_1 = arith.constant 0 : i32
    return %c0_i32, %c0_i32_0 : i32, i32
  }
  func.func @transform_23(%arg0: i32) -> (i32, i32) {
    %c0_i32 = arith.constant 0 : i32
    %c0_i32_0 = arith.constant 0 : i32
    %c0_i32_1 = arith.constant 0 : i32
    return %c0_i32, %c0_i32_0 : i32, i32
  }
  func.func @transform_24(%arg0: i32) -> (i32, i32) {
    %c0_i32 = arith.constant 0 : i32
    %c0_i32_0 = arith.constant 0 : i32
    %c0_i32_1 = arith.constant 0 : i32
    return %c0_i32, %c0_i32_0 : i32, i32
  }
  func.func @transform_25(%arg0: i32) -> (i32, i32) {
    %c0_i32 = arith.constant 0 : i32
    %c0_i32_0 = arith.constant 0 : i32
    %c0_i32_1 = arith.constant 0 : i32
    return %c0_i32, %c0_i32_0 : i32, i32
  }
}

</mosaic_0001>

<llo_original>
// kernel: attgnn_forward.1
$region0: #{attgnn_forward.1}
  #allocation0 [shape = 'u32[]', space=smem, size = 0x4, offset = 0x4, fixed_abs, tag = 'smem constant byte address 0x4 - core index']
  #allocation1 [shape = 'u32[144,128]{1,0:T(1,128)}', space=vmem, size = 0x12000, scoped, tag = 'internal scratch']
  %s0 = inlined_call_operand.vmem [shape: f32[64,256], index: 0, kind: input, shape index: {}]
  %s1 = inlined_call_operand.vmem [shape: bf16[64,64], index: 1, kind: input, shape index: {}]
  %s2 = inlined_call_operand.vmem [shape: bf16[2,64], index: 2, kind: input, shape index: {}]
  %s3 = inlined_call_operand.vmem [shape: f32[64,256], index: 3, kind: input, shape index: {}]
  %s4 = inlined_call_operand.vmem [shape: bf16[64,64], index: 4, kind: input, shape index: {}]
  %s5 = inlined_call_operand.vmem [shape: bf16[2,64], index: 5, kind: input, shape index: {}]
  %s6 = inlined_call_operand.vmem [shape: bf16[256,128], index: 6, kind: input, shape index: {}]
  %s7 = inlined_call_operand.vmem [shape: f32[1,128], index: 7, kind: input, shape index: {}]
  %s8 = inlined_call_operand.vmem [shape: f32[1,128], index: 8, kind: input, shape index: {}]
  %s9 = inlined_call_operand.vmem [shape: f32[1,128], index: 9, kind: input, shape index: {}]
  %s10 = inlined_call_operand.vmem [shape: bf16[256,128], index: 10, kind: input, shape index: {}]
  %s11 = inlined_call_operand.vmem [shape: f32[1,128], index: 11, kind: input, shape index: {}]
  %s12 = inlined_call_operand.vmem [shape: f32[1,128], index: 12, kind: input, shape index: {}]
  %s13 = inlined_call_operand.vmem [shape: f32[1,128], index: 13, kind: input, shape index: {}]
  %s14 = inlined_call_operand.vmem [shape: bf16[128,128], index: 14, kind: input, shape index: {}]
  %s15 = inlined_call_operand.vmem [shape: f32[1,128], index: 15, kind: input, shape index: {}]
  %s16 = inlined_call_operand.vmem [shape: bf16[128,128], index: 16, kind: input, shape index: {}]
  %s17 = inlined_call_operand.vmem [shape: f32[1,128], index: 17, kind: input, shape index: {}]
  %s18 = inlined_call_operand.vmem [shape: bf16[128,256], index: 18, kind: input, shape index: {}]
  %s19 = inlined_call_operand.vmem [shape: bf16[128,256], index: 19, kind: input, shape index: {}]
  %s20 = inlined_call_operand.vmem [shape: f32[1,256], index: 20, kind: input, shape index: {}]
  %s21 = inlined_call_operand.vmem [shape: bf16[256,64], index: 21, kind: input, shape index: {}]
  %s22 = inlined_call_operand.vmem [shape: f32[1,64], index: 22, kind: input, shape index: {}]
  %s23 = inlined_call_operand.vmem [shape: bf16[64,128], index: 23, kind: input, shape index: {}]
  %s24 = inlined_call_operand.vmem [shape: f32[1,128], index: 24, kind: input, shape index: {}]
  %s25 = inlined_call_operand.vmem [shape: f32[2,128], index: 25, kind: output, shape index: {}]
  %s26 = sld [smem:[#allocation0]]
  $region110: #{attgnn_forward.1} parent=0
    _
  %s28 = ssub.s32 1, %s26
  %s29 = scalar_select 0, %s28, %s26
  // Predicated region
  $region2: #{attgnn_forward.1} parent=0 // pred_check
    _
  $region3: #{attgnn_forward.1} parent=0 // pred_check_branch
    %31 = sbr.rel (0) target = $region5
  $region4: #{attgnn_forward.1} parent=0 // pred_region
    _
  $region5: #{attgnn_forward.1} parent=0 // pred_fallthru
    _
  // Predicated region
  $region6: #{attgnn_forward.1} parent=0 // pred_check
    _
  $region7: #{attgnn_forward.1} parent=0 // pred_check_branch
    %33 = sbr.rel (0) target = $region9
  $region8: #{attgnn_forward.1} parent=0 // pred_region
    _
  $region9: #{attgnn_forward.1} parent=0 // pred_fallthru
    _
  // Predicated region
  $region10: #{attgnn_forward.1} parent=0 // pred_check
    _
  $region11: #{attgnn_forward.1} parent=0 // pred_check_branch
    %35 = sbr.rel (0) target = $region13
  $region12: #{attgnn_forward.1} parent=0 // pred_region
    _
  $region13: #{attgnn_forward.1} parent=0 // pred_fallthru
    _
  // Predicated region
  $region14: #{attgnn_forward.1} parent=0 // pred_check
    _
  $region15: #{attgnn_forward.1} parent=0 // pred_check_branch
    %37 = sbr.rel (0) target = $region17
  $region16: #{attgnn_forward.1} parent=0 // pred_region
    _
  $region17: #{attgnn_forward.1} parent=0 // pred_fallthru
    _
  // Predicated region
  $region18: #{attgnn_forward.1} parent=0 // pred_check
    _
  $region19: #{attgnn_forward.1} parent=0 // pred_check_branch
    %39 = sbr.rel (0) target = $region21
  $region20: #{attgnn_forward.1} parent=0 // pred_region
    _
  $region21: #{attgnn_forward.1} parent=0 // pred_fallthru
    _
  // Predicated region
  $region22: #{attgnn_forward.1} parent=0 // pred_check
    _
  $region23: #{attgnn_forward.1} parent=0 // pred_check_branch
    %41 = sbr.rel (0) target = $region25
  $region24: #{attgnn_forward.1} parent=0 // pred_region
    _
  $region25: #{attgnn_forward.1} parent=0 // pred_fallthru
    _
  // Predicated region
  $region26: #{attgnn_forward.1} parent=0 // pred_check
    _
  $region27: #{attgnn_forward.1} parent=0 // pred_check_branch
    %43 = sbr.rel (0) target = $region29
  $region28: #{attgnn_forward.1} parent=0 // pred_region
    _
  $region29: #{attgnn_forward.1} parent=0 // pred_fallthru
    _
  // Predicated region
  $region30: #{attgnn_forward.1} parent=0 // pred_check
    _
  $region31: #{attgnn_forward.1} parent=0 // pred_check_branch
    %45 = sbr.rel (0) target = $region33
  $region32: #{attgnn_forward.1} parent=0 // pred_region
    _
  $region33: #{attgnn_forward.1} parent=0 // pred_fallthru
    _
  // Predicated region
  $region34: #{attgnn_forward.1} parent=0 // pred_check
    _
  $region35: #{attgnn_forward.1} parent=0 // pred_check_branch
    %47 = sbr.rel (0) target = $region37
  $region36: #{attgnn_forward.1} parent=0 // pred_region
    _
  $region37: #{attgnn_forward.1} parent=0 // pred_fallthru
    _
  // Predicated region
  $region38: #{attgnn_forward.1} parent=0 // pred_check
    _
  $region39: #{attgnn_forward.1} parent=0 // pred_check_branch
    %49 = sbr.rel (0) target = $region41
  $region40: #{attgnn_forward.1} parent=0 // pred_region
    _
  $region41: #{attgnn_forward.1} parent=0 // pred_fallthru
    _
  // Predicated region
  $region42: #{attgnn_forward.1} parent=0 // pred_check
    _
  $region43: #{attgnn_forward.1} parent=0 // pred_check_branch
    %51 = sbr.rel (0) target = $region45
  $region44: #{attgnn_forward.1} parent=0 // pred_region
    _
  $region45: #{attgnn_forward.1} parent=0 // pred_fallthru
    _
  // Predicated region
  $region46: #{attgnn_forward.1} parent=0 // pred_check
    _
  $region47: #{attgnn_forward.1} parent=0 // pred_check_branch
    %53 = sbr.rel (0) target = $region49
  $region48: #{attgnn_forward.1} parent=0 // pred_region
    _
  $region49: #{attgnn_forward.1} parent=0 // pred_fallthru
    _
  // Predicated region
  $region50: #{attgnn_forward.1} parent=0 // pred_check
    _
  $region51: #{attgnn_forward.1} parent=0 // pred_check_branch
    %55 = sbr.rel (0) target = $region53
  $region52: #{attgnn_forward.1} parent=0 // pred_region
    _
  $region53: #{attgnn_forward.1} parent=0 // pred_fallthru
    _
  // Predicated region
  $region54: #{attgnn_forward.1} parent=0 // pred_check
    _
  $region55: #{attgnn_forward.1} parent=0 // pred_check_branch
    %57 = sbr.rel (0) target = $region57
  $region56: #{attgnn_forward.1} parent=0 // pred_region
    _
  $region57: #{attgnn_forward.1} parent=0 // pred_fallthru
    _
  // Predicated region
  $region58: #{attgnn_forward.1} parent=0 // pred_check
    _
  $region59: #{attgnn_forward.1} parent=0 // pred_check_branch
    %59 = sbr.rel (0) target = $region61
  $region60: #{attgnn_forward.1} parent=0 // pred_region
    _
  $region61: #{attgnn_forward.1} parent=0 // pred_fallthru
    _
  // Predicated region
  $region62: #{attgnn_forward.1} parent=0 // pred_check
    _
  $region63: #{attgnn_forward.1} parent=0 // pred_check_branch
    %61 = sbr.rel (0) target = $region65
  $region64: #{attgnn_forward.1} parent=0 // pred_region
    _
  $region65: #{attgnn_forward.1} parent=0 // pred_fallthru
    _
  // Predicated region
  $region66: #{attgnn_forward.1} parent=0 // pred_check
    _
  $region67: #{attgnn_forward.1} parent=0 // pred_check_branch
    %63 = sbr.rel (0) target = $region69
  $region68: #{attgnn_forward.1} parent=0 // pred_region
    _
  $region69: #{attgnn_forward.1} parent=0 // pred_fallthru
    _
  // Predicated region
  $region70: #{attgnn_forward.1} parent=0 // pred_check
    _
  $region71: #{attgnn_forward.1} parent=0 // pred_check_branch
    %65 = sbr.rel (0) target = $region73
  $region72: #{attgnn_forward.1} parent=0 // pred_region
    _
  $region73: #{attgnn_forward.1} parent=0 // pred_fallthru
    _
  // Predicated region
  $region74: #{attgnn_forward.1} parent=0 // pred_check
    _
  $region75: #{attgnn_forward.1} parent=0 // pred_check_branch
    %67 = sbr.rel (0) target = $region77
  $region76: #{attgnn_forward.1} parent=0 // pred_region
    _
  $region77: #{attgnn_forward.1} parent=0 // pred_fallthru
    _
  // Predicated region
  $region78: #{attgnn_forward.1} parent=0 // pred_check
    _
  $region79: #{attgnn_forward.1} parent=0 // pred_check_branch
    %69 = sbr.rel (0) target = $region81
  $region80: #{attgnn_forward.1} parent=0 // pred_region
    _
  $region81: #{attgnn_forward.1} parent=0 // pred_fallthru
    _
  // Predicated region
  $region82: #{attgnn_forward.1} parent=0 // pred_check
    _
  $region83: #{attgnn_forward.1} parent=0 // pred_check_branch
    %71 = sbr.rel (0) target = $region85
  $region84: #{attgnn_forward.1} parent=0 // pred_region
    _
  $region85: #{attgnn_forward.1} parent=0 // pred_fallthru
    _
  // Predicated region
  $region86: #{attgnn_forward.1} parent=0 // pred_check
    _
  $region87: #{attgnn_forward.1} parent=0 // pred_check_branch
    %73 = sbr.rel (0) target = $region89
  $region88: #{attgnn_forward.1} parent=0 // pred_region
    _
  $region89: #{attgnn_forward.1} parent=0 // pred_fallthru
    _
  // Predicated region
  $region90: #{attgnn_forward.1} parent=0 // pred_check
    _
  $region91: #{attgnn_forward.1} parent=0 // pred_check_branch
    %75 = sbr.rel (0) target = $region93
  $region92: #{attgnn_forward.1} parent=0 // pred_region
    _
  $region93: #{attgnn_forward.1} parent=0 // pred_fallthru
    _
  // Predicated region
  $region94: #{attgnn_forward.1} parent=0 // pred_check
    _
  $region95: #{attgnn_forward.1} parent=0 // pred_check_branch
    %77 = sbr.rel (0) target = $region97
  $region96: #{attgnn_forward.1} parent=0 // pred_region
    _
  $region97: #{attgnn_forward.1} parent=0 // pred_fallthru
    _
  // Predicated region
  $region98: #{attgnn_forward.1} parent=0 // pred_check
    _
  $region99: #{attgnn_forward.1} parent=0 // pred_check_branch
    %79 = sbr.rel (0) target = $region101
  $region100: #{attgnn_forward.1} parent=0 // pred_region
    _
  $region101: #{attgnn_forward.1} parent=0 // pred_fallthru
    _
  %v83 = vld [vmem:[%s0] sm:$0xff]
  %v84 = vld [vmem:[%s0 + $0x8] sm:$0xff]
  %v85 = vld [vmem:[%s0 + $0x10] sm:$0xff]
  %v86 = vld [vmem:[%s0 + $0x18] sm:$0xff]
  %v87 = vld [vmem:[%s0 + $0x20] sm:$0xff]
  %v88 = vld [vmem:[%s0 + $0x28] sm:$0xff]
  %v89 = vld [vmem:[%s0 + $0x30] sm:$0xff]
  %v90 = vld [vmem:[%s0 + $0x38] sm:$0xff]
  %v91 = vld [vmem:[%s0 + $0x40] sm:$0xff]
  %v92 = vld [vmem:[%s0 + $0x48] sm:$0xff]
  %v93 = vld [vmem:[%s0 + $0x50] sm:$0xff]
  %v94 = vld [vmem:[%s0 + $0x58] sm:$0xff]
  %v95 = vld [vmem:[%s0 + $0x60] sm:$0xff]
  %v96 = vld [vmem:[%s0 + $0x68] sm:$0xff]
  %v97 = vld [vmem:[%s0 + $0x70] sm:$0xff]
  %v98 = vld [vmem:[%s0 + $0x78] sm:$0xff]
  %v99 = vld [vmem:[%s1] sm:$0xf]
  %v100 = vld [vmem:[%s1 + $0x4] sm:$0xf]
  %v101 = vld [vmem:[%s1 + $0x8] sm:$0xf]
  %v102 = vld [vmem:[%s1 + $0xc] sm:$0xf]
  %v103 = vld [vmem:[%s1 + $0x10] sm:$0xf]
  %v104 = vld [vmem:[%s1 + $0x14] sm:$0xf]
  %v105 = vld [vmem:[%s1 + $0x18] sm:$0xf]
  %v106 = vld [vmem:[%s1 + $0x1c] sm:$0xf]
  %v107 = vld [vmem:[%s6] sm:$0xf]
  %v108 = vld [vmem:[%s6 + $0x4] sm:$0xf]
  %v109 = vld [vmem:[%s6 + $0x8] sm:$0xf]
  %v110 = vld [vmem:[%s6 + $0xc] sm:$0xf]
  %v111 = vld [vmem:[%s6 + $0x10] sm:$0xf]
  %v112 = vld [vmem:[%s6 + $0x14] sm:$0xf]
  %v113 = vld [vmem:[%s6 + $0x18] sm:$0xf]
  %v114 = vld [vmem:[%s6 + $0x1c] sm:$0xf]
  %v115 = vld [vmem:[%s6 + $0x20] sm:$0xf]
  %v116 = vld [vmem:[%s6 + $0x24] sm:$0xf]
  %v117 = vld [vmem:[%s6 + $0x28] sm:$0xf]
  %v118 = vld [vmem:[%s6 + $0x2c] sm:$0xf]
  %v119 = vld [vmem:[%s6 + $0x30] sm:$0xf]
  %v120 = vld [vmem:[%s6 + $0x34] sm:$0xf]
  %v121 = vld [vmem:[%s6 + $0x38] sm:$0xf]
  %v122 = vld [vmem:[%s6 + $0x3c] sm:$0xf]
  %v123 = vld [vmem:[%s6 + $0x40] sm:$0xf]
  %v124 = vld [vmem:[%s6 + $0x44] sm:$0xf]
  %v125 = vld [vmem:[%s6 + $0x48] sm:$0xf]
  %v126 = vld [vmem:[%s6 + $0x4c] sm:$0xf]
  %v127 = vld [vmem:[%s6 + $0x50] sm:$0xf]
  %v128 = vld [vmem:[%s6 + $0x54] sm:$0xf]
  %v129 = vld [vmem:[%s6 + $0x58] sm:$0xf]
  %v130 = vld [vmem:[%s6 + $0x5c] sm:$0xf]
  %v131 = vld [vmem:[%s6 + $0x60] sm:$0xf]
  %v132 = vld [vmem:[%s6 + $0x64] sm:$0xf]
  %v133 = vld [vmem:[%s6 + $0x68] sm:$0xf]
  %v134 = vld [vmem:[%s6 + $0x6c] sm:$0xf]
  %v135 = vld [vmem:[%s6 + $0x70] sm:$0xf]
  %v136 = vld [vmem:[%s6 + $0x74] sm:$0xf]
  %v137 = vld [vmem:[%s6 + $0x78] sm:$0xf]
  %v138 = vld [vmem:[%s6 + $0x7c] sm:$0xf]
  %v139 = vld [vmem:[%s7] sm:$0x1]
  %v140 = vld [vmem:[%s8] sm:$0x1]
  %v141 = vld [vmem:[%s9] sm:$0x1]
  %v142 = vpack.c.bf16 %v85, %v83
  %v143 = vpack.c.bf16 %v86, %v84
  %v144 = vpack.c.bf16 %v89, %v87
  %v145 = vpack.c.bf16 %v90, %v88
  %v146 = vpack.c.bf16 %v93, %v91
  %v147 = vpack.c.bf16 %v94, %v92
  %v148 = vpack.c.bf16 %v97, %v95
  %v149 = vpack.c.bf16 %v98, %v96
  %v182 = vunpack.c.l.b16 %v107
  %v183 = vunpack.c.l.b16 %v108
  %v184 = vunpack.c.l.b16 %v109
  %v185 = vunpack.c.l.b16 %v110
  %v186 = vunpack.c.l.b16 %v111
  %v187 = vunpack.c.l.b16 %v112
  %v188 = vunpack.c.l.b16 %v113
  %v189 = vunpack.c.l.b16 %v114
  %v190 = vunpack.c.l.b16 %v115
  %v191 = vunpack.c.l.b16 %v116
  %v192 = vunpack.c.l.b16 %v117
  %v193 = vunpack.c.l.b16 %v118
  %v194 = vunpack.c.l.b16 %v119
  %v195 = vunpack.c.l.b16 %v120
  %v196 = vunpack.c.l.b16 %v121
  %v197 = vunpack.c.l.b16 %v122
  %v198 = vunpack.c.l.b16 %v123
  %v199 = vunpack.c.l.b16 %v124
  %v200 = vunpack.c.l.b16 %v125
  %v201 = vunpack.c.l.b16 %v126
  %v202 = vunpack.c.l.b16 %v127
  %v203 = vunpack.c.l.b16 %v128
  %v204 = vunpack.c.l.b16 %v129
  %v205 = vunpack.c.l.b16 %v130
  %v206 = vunpack.c.l.b16 %v131
  %v207 = vunpack.c.l.b16 %v132
  %v208 = vunpack.c.l.b16 %v133
  %v209 = vunpack.c.l.b16 %v134
  %v210 = vunpack.c.l.b16 %v135
  %v211 = vunpack.c.l.b16 %v136
  %v212 = vunpack.c.l.b16 %v137
  %v213 = vunpack.c.l.b16 %v138
  %v214 = vpack.c.b16 %v183, %v182
  %v215 = vpack.c.b16 %v185, %v184
  %v216 = vpack.c.b16 %v187, %v186
  %v217 = vpack.c.b16 %v189, %v188
  %v218 = vpack.c.b16 %v191, %v190
  %v219 = vpack.c.b16 %v193, %v192
  %v220 = vpack.c.b16 %v195, %v194
  %v221 = vpack.c.b16 %v197, %v196
  %v222 = vpack.c.b16 %v199, %v198
  %v223 = vpack.c.b16 %v201, %v200
  %v224 = vpack.c.b16 %v203, %v202
  %v225 = vpack.c.b16 %v205, %v204
  %v226 = vpack.c.b16 %v207, %v206
  %v227 = vpack.c.b16 %v209, %v208
  %v228 = vpack.c.b16 %v211, %v210
  %v229 = vpack.c.b16 %v213, %v212
  %246 = vmatprep.subr.bf16.mxu0 0
  %247 = vmatpush1.bf16.msra.mxu0 %v221
  %248 = vmatprep.subr.bf16.mxu0 0
  %249 = vmatpush1.bf16.msra.mxu0 %v220
  %250 = vmatprep.subr.bf16.mxu0 0
  %251 = vmatpush1.bf16.msra.mxu0 %v219
  %252 = vmatprep.subr.bf16.mxu0 0
  %253 = vmatpush1.bf16.msra.mxu0 %v218
  %254 = vmatprep.subr.bf16.mxu0 0
  %255 = vmatpush1.bf16.msra.mxu0 %v217
  %256 = vmatprep.subr.bf16.mxu0 0
  %257 = vmatpush1.bf16.msra.mxu0 %v216
  %258 = vmatprep.subr.bf16.mxu0 0
  %259 = vmatpush1.bf16.msra.mxu0 %v215
  %260 = vmatprep.subr.bf16.mxu0 0
  %261 = vmatpush1.bf16.msra.mxu0 %v214
  %262 = vmatprep.subr.bf16.mxu0 0
  %263 = vmatpush2.bf16.msra.mxu0 %v229
  %264 = vmatprep.subr.bf16.mxu0 0
  %265 = vmatpush2.bf16.msra.mxu0 %v228
  %266 = vmatprep.subr.bf16.mxu0 0
  %267 = vmatpush2.bf16.msra.mxu0 %v227
  %268 = vmatprep.subr.bf16.mxu0 0
  %269 = vmatpush2.bf16.msra.mxu0 %v226
  %270 = vmatprep.subr.bf16.mxu0 0
  %271 = vmatpush2.bf16.msra.mxu0 %v225
  %272 = vmatprep.subr.bf16.mxu0 0
  %273 = vmatpush2.bf16.msra.mxu0 %v224
  %274 = vmatprep.subr.bf16.mxu0 0
  %275 = vmatpush2.bf16.msra.mxu0 %v223
  %276 = vmatprep.subr.bf16.mxu0 0
  %277 = vmatpush2.bf16.msra.mxu0 %v222
  %278 = vmatprep.mubr.bf16.mxu0 %v143
  %279 = vmatmul.mubr.bf16.gmra.mxu0 %v142
  %v280 = vpop.f32.mrf.mxu0
  %v281 = vadd.f32 0.0, %v280
  %v282 = vpop.f32.mrf.mxu0
  %v283 = vpop.f32.mrf.mxu0
  %v284 = vadd.f32 0.0, %v283
  %v285 = vpop.f32.mrf.mxu0
  %286 = vmatprep.mubr.bf16.mxu0 %v145
  %287 = vmatmul.mubr.bf16.gmra.mxu0 %v144
  %v288 = vpop.f32.mrf.mxu0
  %v289 = vadd.f32 0.0, %v288
  %v290 = vpop.f32.mrf.mxu0
  %v291 = vpop.f32.mrf.mxu0
  %v292 = vadd.f32 0.0, %v291
  %v293 = vpop.f32.mrf.mxu0
  %294 = vmatprep.mubr.bf16.mxu0 %v147
  %295 = vmatmul.mubr.bf16.gmra.mxu0 %v146
  %v296 = vpop.f32.mrf.mxu0
  %v297 = vadd.f32 0.0, %v296
  %v298 = vpop.f32.mrf.mxu0
  %v299 = vpop.f32.mrf.mxu0
  %v300 = vadd.f32 0.0, %v299
  %v301 = vpop.f32.mrf.mxu0
  %302 = vmatprep.mubr.bf16.mxu0 %v149
  %303 = vmatmul.mubr.bf16.gmra.mxu0 %v148
  %v304 = vpop.f32.mrf.mxu0
  %v305 = vadd.f32 0.0, %v304
  %v306 = vpop.f32.mrf.mxu0
  %v307 = vpop.f32.mrf.mxu0
  %v308 = vadd.f32 0.0, %v307
  %v309 = vpop.f32.mrf.mxu0
  %310 = vdwg.mxu0
  %v311 = vpack.c.bf16 %v284, %v281
  %v312 = vpack.c.bf16 %v292, %v289
  %v313 = vpack.c.bf16 %v300, %v297
  %v314 = vpack.c.bf16 %v308, %v305
  %v316 = vlaneseq
  %v317 = vshrl.u32 %v316, 7
  %v318 = vsub.s32 0, %v317
  %v319 = vrot.slane %v140, %v318
  %v321 = vmul.f32 %v281, %v319
  %v322 = vmul.f32 %v284, %v319
  %v323 = vmul.f32 %v289, %v319
  %v324 = vmul.f32 %v292, %v319
  %v325 = vmul.f32 %v297, %v319
  %v326 = vmul.f32 %v300, %v319
  %v327 = vmul.f32 %v305, %v319
  %v328 = vmul.f32 %v308, %v319
  %329 = vadd.xlane.f32.xlu0 %v321
  %v330 = vpop.xlane.xlu0 %329
  %331 = vadd.xlane.f32.xlu0 %v322
  %v332 = vpop.xlane.xlu0 %331
  %333 = vadd.xlane.f32.xlu0 %v323
  %v334 = vpop.xlane.xlu0 %333
  %335 = vadd.xlane.f32.xlu0 %v324
  %v336 = vpop.xlane.xlu0 %335
  %337 = vadd.xlane.f32.xlu0 %v325
  %v338 = vpop.xlane.xlu0 %337
  %339 = vadd.xlane.f32.xlu0 %v326
  %v340 = vpop.xlane.xlu0 %339
  %341 = vadd.xlane.f32.xlu0 %v327
  %v342 = vpop.xlane.xlu0 %341
  %343 = vadd.xlane.f32.xlu0 %v328
  %v344 = vpop.xlane.xlu0 %343
  %v345 = vpack.c.bf16 %v139, %v139
  %346 = vmatprep.subr.bf16.mxu0 0
  %347 = vmatpush1.bf16.xpose.msra.mxu0 0
  %348 = vmatprep.subr.bf16.mxu0 0
  %349 = vmatpush1.bf16.xpose.msra.mxu0 0
  %350 = vmatprep.subr.bf16.mxu0 0
  %351 = vmatpush1.bf16.xpose.msra.mxu0 0
  %352 = vmatprep.subr.bf16.mxu0 0
  %353 = vmatpush1.bf16.xpose.msra.mxu0 0
  %354 = vmatprep.subr.bf16.mxu0 0
  %355 = vmatpush1.bf16.xpose.msra.mxu0 %v314
  %356 = vmatprep.subr.bf16.mxu0 0
  %357 = vmatpush1.bf16.xpose.msra.mxu0 %v313
  %358 = vmatprep.subr.bf16.mxu0 0
  %359 = vmatpush1.bf16.xpose.msra.mxu0 %v312
  %360 = vmatprep.subr.bf16.mxu0 0
  %361 = vmatpush1.bf16.xpose.msra.mxu0 %v311
  %362 = vmatprep.subr.bf16.mxu0 0
  %363 = vmatpush2.bf16.xpose.msra.mxu0 0
  %364 = vmatprep.subr.bf16.mxu0 0
  %365 = vmatpush2.bf16.xpose.msra.mxu0 0
  %366 = vmatprep.subr.bf16.mxu0 0
  %367 = vmatpush2.bf16.xpose.msra.mxu0 0
  %368 = vmatprep.subr.bf16.mxu0 0
  %369 = vmatpush2.bf16.xpose.msra.mxu0 0
  %370 = vmatprep.subr.bf16.mxu0 0
  %371 = vmatpush2.bf16.xpose.msra.mxu0 0
  %372 = vmatprep.subr.bf16.mxu0 0
  %373 = vmatpush2.bf16.xpose.msra.mxu0 0
  %374 = vmatprep.subr.bf16.mxu0 0
  %375 = vmatpush2.bf16.xpose.msra.mxu0 0
  %376 = vmatprep.subr.bf16.mxu0 0
  %377 = vmatpush2.bf16.xpose.msra.mxu0 0
  %378 = vmatprep.mubr.bf16.mxu0 0
  %379 = vmatmul.mubr.bf16.gmra.mxu0 %v345
  %v380 = vpop.f32.mrf.mxu0
  %v381 = vadd.f32 0.0, %v380
  %v382 = vpop.f32.mrf.mxu0
  %v383 = vpop.f32.mrf.mxu0
  %v384 = vpop.f32.mrf.mxu0
  %385 = vdwg.mxu0
  %v386 = vlaneseq
  %v387 = vshrl.u32 %v386, 7
  %v388 = vsub.s32 0, %v387
  %v389 = vrot.slane %v381, %v388
  %v390 = vadd.f32 %v330, %v389
  %v391 = vadd.f32 %v332, %v389
  %v392 = vadd.f32 %v334, %v389
  %v393 = vadd.f32 %v336, %v389
  %v394 = vadd.f32 %v338, %v389
  %v395 = vadd.f32 %v340, %v389
  %v396 = vadd.f32 %v342, %v389
  %v397 = vadd.f32 %v344, %v389
  %vm398 = vcmp.gt.f32.partialorder %v390, 0.0
  %vm399 = vcmp.gt.f32.partialorder %v391, 0.0
  %vm400 = vcmp.gt.f32.partialorder %v392, 0.0
  %vm401 = vcmp.gt.f32.partialorder %v393, 0.0
  %vm402 = vcmp.gt.f32.partialorder %v394, 0.0
  %vm403 = vcmp.gt.f32.partialorder %v395, 0.0
  %vm404 = vcmp.gt.f32.partialorder %v396, 0.0
  %vm405 = vcmp.gt.f32.partialorder %v397, 0.0
  %v406 = vmul.f32 %v390, 0.2
  %v407 = vmul.f32 %v391, 0.2
  %v408 = vmul.f32 %v392, 0.2
  %v409 = vmul.f32 %v393, 0.2
  %v410 = vmul.f32 %v394, 0.2
  %v411 = vmul.f32 %v395, 0.2
  %v412 = vmul.f32 %v396, 0.2
  %v413 = vmul.f32 %v397, 0.2
  %v414 = vsel %vm398, %v390, %v406
  %v415 = vsel %vm399, %v391, %v407
  %v416 = vsel %vm400, %v392, %v408
  %v417 = vsel %vm401, %v393, %v409
  %v418 = vsel %vm402, %v394, %v410
  %v419 = vsel %vm403, %v395, %v411
  %v420 = vsel %vm404, %v396, %v412
  %v421 = vsel %vm405, %v397, %v413
  %vm422 = vcmp.gt.bf16.partialorder %v99, 0
  %vm423 = vcmp.gt.bf16.partialorder %v100, 0
  %vm424 = vcmp.gt.bf16.partialorder %v101, 0
  %vm425 = vcmp.gt.bf16.partialorder %v102, 0
  %vm426 = vcmp.gt.bf16.partialorder %v103, 0
  %vm427 = vcmp.gt.bf16.partialorder %v104, 0
  %vm428 = vcmp.gt.bf16.partialorder %v105, 0
  %vm429 = vcmp.gt.bf16.partialorder %v106, 0
  %v430 = vsel %vm422, 65537, 0
  %v431 = vsel %vm423, 65537, 0
  %v432 = vsel %vm424, 65537, 0
  %v433 = vsel %vm425, 65537, 0
  %v434 = vsel %vm426, 65537, 0
  %v435 = vsel %vm427, 65537, 0
  %v436 = vsel %vm428, 65537, 0
  %v437 = vsel %vm429, 65537, 0
  %v438 = vunpack.c.l.b16 %v430
  %v439 = vunpack.c.l.b16 %v431
  %v440 = vunpack.c.l.b16 %v432
  %v441 = vunpack.c.l.b16 %v433
  %v442 = vunpack.c.l.b16 %v434
  %v443 = vunpack.c.l.b16 %v435
  %v444 = vunpack.c.l.b16 %v436
  %v445 = vunpack.c.l.b16 %v437
  %vm446 = vcmp.ne.s32.totalorder %v438, 0
  %vm447 = vcmp.ne.s32.totalorder %v439, 0
  %vm448 = vcmp.ne.s32.totalorder %v440, 0
  %vm449 = vcmp.ne.s32.totalorder %v441, 0
  %vm450 = vcmp.ne.s32.totalorder %v442, 0
  %vm451 = vcmp.ne.s32.totalorder %v443, 0
  %vm452 = vcmp.ne.s32.totalorder %v444, 0
  %vm453 = vcmp.ne.s32.totalorder %v445, 0
  %v454 = vsel %vm446, %v414, -1e+30
  %v455 = vsel %vm447, %v415, -1e+30
  %v456 = vsel %vm448, %v416, -1e+30
  %v457 = vsel %vm449, %v417, -1e+30
  %v458 = vsel %vm450, %v418, -1e+30
  %v459 = vsel %vm451, %v419, -1e+30
  %v460 = vsel %vm452, %v420, -1e+30
  %v461 = vsel %vm453, %v421, -1e+30
  %vm462 = vcmask 523264
  %v463 = vsel %vm462, %v454, -inf
  %464 = vmax.xlane.f32.xlu0 %v463
  %v465 = vpop.xlane.xlu0 %464
  %v466 = vsel %vm462, %v455, -inf
  %467 = vmax.xlane.f32.xlu0 %v466
  %v468 = vpop.xlane.xlu0 %467
  %v469 = vsel %vm462, %v456, -inf
  %470 = vmax.xlane.f32.xlu0 %v469
  %v471 = vpop.xlane.xlu0 %470
  %v472 = vsel %vm462, %v457, -inf
  %473 = vmax.xlane.f32.xlu0 %v472
  %v474 = vpop.xlane.xlu0 %473
  %v475 = vsel %vm462, %v458, -inf
  %476 = vmax.xlane.f32.xlu0 %v475
  %v477 = vpop.xlane.xlu0 %476
  %v478 = vsel %vm462, %v459, -inf
  %479 = vmax.xlane.f32.xlu0 %v478
  %v480 = vpop.xlane.xlu0 %479
  %v481 = vsel %vm462, %v460, -inf
  %482 = vmax.xlane.f32.xlu0 %v481
  %v483 = vpop.xlane.xlu0 %482
  %v484 = vsel %vm462, %v461, -inf
  %485 = vmax.xlane.f32.xlu0 %v484
  %v486 = vpop.xlane.xlu0 %485
  %v487 = vsub.f32 %v454, %v465
  %v488 = vsub.f32 %v455, %v468
  %v489 = vsub.f32 %v456, %v471
  %v490 = vsub.f32 %v457, %v474
  %v491 = vsub.f32 %v458, %v477
  %v492 = vsub.f32 %v459, %v480
  %v493 = vsub.f32 %v460, %v483
  %v494 = vsub.f32 %v461, %v486
  %v495 = vmul.f32 %v487, 1.442695
  %v496 = vpow.pop %v495
  %v497 = vmul.f32 %v488, 1.442695
  %v498 = vpow.pop %v497
  %v499 = vmul.f32 %v489, 1.442695
  %v500 = vpow.pop %v499
  %v501 = vmul.f32 %v490, 1.442695
  %v502 = vpow.pop %v501
  %v503 = vmul.f32 %v491, 1.442695
  %v504 = vpow.pop %v503
  %v505 = vmul.f32 %v492, 1.442695
  %v506 = vpow.pop %v505
  %v507 = vmul.f32 %v493, 1.442695
  %v508 = vpow.pop %v507
  %v509 = vmul.f32 %v494, 1.442695
  %v510 = vpow.pop %v509
  %v511 = vsel %vm462, %v496, 0.0
  %512 = vadd.xlane.f32.xlu0 %v511
  %v513 = vpop.xlane.xlu0 %512
  %v514 = vsel %vm462, %v498, 0.0
  %515 = vadd.xlane.f32.xlu0 %v514
  %v516 = vpop.xlane.xlu0 %515
  %v517 = vsel %vm462, %v500, 0.0
  %518 = vadd.xlane.f32.xlu0 %v517
  %v519 = vpop.xlane.xlu0 %518
  %v520 = vsel %vm462, %v502, 0.0
  %521 = vadd.xlane.f32.xlu0 %v520
  %v522 = vpop.xlane.xlu0 %521
  %v523 = vsel %vm462, %v504, 0.0
  %524 = vadd.xlane.f32.xlu0 %v523
  %v525 = vpop.xlane.xlu0 %524
  %v526 = vsel %vm462, %v506, 0.0
  %527 = vadd.xlane.f32.xlu0 %v526
  %v528 = vpop.xlane.xlu0 %527
  %v529 = vsel %vm462, %v508, 0.0
  %530 = vadd.xlane.f32.xlu0 %v529
  %v531 = vpop.xlane.xlu0 %530
  %v532 = vsel %vm462, %v510, 0.0
  %533 = vadd.xlane.f32.xlu0 %v532
  %v534 = vpop.xlane.xlu0 %533
  %v535 = vrcp.pop %v513
  %v536 = vmul.f32 %v496, %v535
  %v537 = vrcp.pop %v516
  %v538 = vmul.f32 %v498, %v537
  %v539 = vrcp.pop %v519
  %v540 = vmul.f32 %v500, %v539
  %v541 = vrcp.pop %v522
  %v542 = vmul.f32 %v502, %v541
  %v543 = vrcp.pop %v525
  %v544 = vmul.f32 %v504, %v543
  %v545 = vrcp.pop %v528
  %v546 = vmul.f32 %v506, %v545
  %v547 = vrcp.pop %v531
  %v548 = vmul.f32 %v508, %v547
  %v549 = vrcp.pop %v534
  %v550 = vmul.f32 %v510, %v549
  %v551 = vpack.c.bf16 %v538, %v536
  %v552 = vpack.c.bf16 %v542, %v540
  %v553 = vpack.c.bf16 %v546, %v544
  %v554 = vpack.c.bf16 %v550, %v548
  %v556 = vlaneseq
  %v557 = vshrl.u32 %v556, 7
  %v558 = vsub.s32 0, %v557
  %v559 = vrot.slane %v141, %v558
  %v562 = vsel %vm462, %v551, 0
  %v565 = vsel %vm462, %v552, 0
  %v568 = vsel %vm462, %v553, 0
  %v571 = vsel %vm462, %v554, 0
  %573 = vmatprep.subr.bf16.mxu0 0
  %574 = vmatpush1.bf16.msra.mxu0 0
  %575 = vmatprep.subr.bf16.mxu0 0
  %576 = vmatpush1.bf16.msra.mxu0 0
  %577 = vmatprep.subr.bf16.mxu0 0
  %578 = vmatpush1.bf16.msra.mxu0 0
  %579 = vmatprep.subr.bf16.mxu0 0
  %580 = vmatpush1.bf16.msra.mxu0 0
  %581 = vmatprep.subr.bf16.mxu0 0
  %582 = vmatpush1.bf16.msra.mxu0 %v314
  %583 = vmatprep.subr.bf16.mxu0 0
  %584 = vmatpush1.bf16.msra.mxu0 %v313
  %585 = vmatprep.subr.bf16.mxu0 0
  %586 = vmatpush1.bf16.msra.mxu0 %v312
  %587 = vmatprep.subr.bf16.mxu0 0
  %588 = vmatpush1.bf16.msra.mxu0 %v311
  %589 = vmatprep.subr.bf16.mxu0 0
  %590 = vmatpush2.bf16.msra.mxu0 0
  %591 = vmatprep.subr.bf16.mxu0 0
  %592 = vmatpush2.bf16.msra.mxu0 0
  %593 = vmatprep.subr.bf16.mxu0 0
  %594 = vmatpush2.bf16.msra.mxu0 0
  %595 = vmatprep.subr.bf16.mxu0 0
  %596 = vmatpush2.bf16.msra.mxu0 0
  %597 = vmatprep.subr.bf16.mxu0 0
  %598 = vmatpush2.bf16.msra.mxu0 0
  %599 = vmatprep.subr.bf16.mxu0 0
  %600 = vmatpush2.bf16.msra.mxu0 0
  %601 = vmatprep.subr.bf16.mxu0 0
  %602 = vmatpush2.bf16.msra.mxu0 0
  %603 = vmatprep.subr.bf16.mxu0 0
  %604 = vmatpush2.bf16.msra.mxu0 0
  %605 = vmatprep.mubr.bf16.mxu0 0
  %606 = vmatmul.mubr.bf16.gmra.mxu0 %v562
  %v607 = vpop.f32.mrf.mxu0
  %v608 = vadd.f32 %v559, %v607
  %v609 = vpop.f32.mrf.mxu0
  %v610 = vpop.f32.mrf.mxu0
  %v611 = vadd.f32 %v559, %v610
  %v612 = vpop.f32.mrf.mxu0
  %613 = vmatprep.mubr.bf16.mxu0 0
  %614 = vmatmul.mubr.bf16.gmra.mxu0 %v565
  %v615 = vpop.f32.mrf.mxu0
  %v616 = vadd.f32 %v559, %v615
  %v617 = vpop.f32.mrf.mxu0
  %v618 = vpop.f32.mrf.mxu0
  %v619 = vadd.f32 %v559, %v618
  %v620 = vpop.f32.mrf.mxu0
  %621 = vmatprep.mubr.bf16.mxu0 0
  %622 = vmatmul.mubr.bf16.gmra.mxu0 %v568
  %v623 = vpop.f32.mrf.mxu0
  %v624 = vadd.f32 %v559, %v623
  %v625 = vpop.f32.mrf.mxu0
  %v626 = vpop.f32.mrf.mxu0
  %v627 = vadd.f32 %v559, %v626
  %v628 = vpop.f32.mrf.mxu0
  %629 = vmatprep.mubr.bf16.mxu0 0
  %630 = vmatmul.mubr.bf16.gmra.mxu0 %v571
  %v631 = vpop.f32.mrf.mxu0
  %v632 = vadd.f32 %v559, %v631
  %v633 = vpop.f32.mrf.mxu0
  %v634 = vpop.f32.mrf.mxu0
  %v635 = vadd.f32 %v559, %v634
  %v636 = vpop.f32.mrf.mxu0
  %637 = vdwg.mxu0
  %vm638 = vcmp.gt.f32.partialorder %v608, 0.0
  %vm639 = vcmp.gt.f32.partialorder %v611, 0.0
  %vm640 = vcmp.gt.f32.partialorder %v616, 0.0
  %vm641 = vcmp.gt.f32.partialorder %v619, 0.0
  %vm642 = vcmp.gt.f32.partialorder %v624, 0.0
  %vm643 = vcmp.gt.f32.partialorder %v627, 0.0
  %vm644 = vcmp.gt.f32.partialorder %v632, 0.0
  %vm645 = vcmp.gt.f32.partialorder %v635, 0.0
  %v646 = vmul.f32 %v608, 0.01
  %v647 = vmul.f32 %v611, 0.01
  %v648 = vmul.f32 %v616, 0.01
  %v649 = vmul.f32 %v619, 0.01
  %v650 = vmul.f32 %v624, 0.01
  %v651 = vmul.f32 %v627, 0.01
  %v652 = vmul.f32 %v632, 0.01
  %v653 = vmul.f32 %v635, 0.01
  %v654 = vsel %vm638, %v608, %v646
  %v655 = vsel %vm639, %v611, %v647
  %v656 = vsel %vm640, %v616, %v648
  %v657 = vsel %vm641, %v619, %v649
  %v658 = vsel %vm642, %v624, %v650
  %v659 = vsel %vm643, %v627, %v651
  %v660 = vsel %vm644, %v632, %v652
  %v661 = vsel %vm645, %v635, %v653
  %v662 = vld [vmem:[%s2] sm:$0x1]
  %v663 = vpack.c.bf16 %v655, %v654
  %v664 = vpack.c.bf16 %v657, %v656
  %v665 = vpack.c.bf16 %v659, %v658
  %v666 = vpack.c.bf16 %v661, %v660
  %v668 = vsel %vm462, %v662, 0
  %670 = vmatprep.subr.bf16.mxu0 0
  %671 = vmatpush1.bf16.msra.mxu0 0
  %672 = vmatprep.subr.bf16.mxu0 0
  %673 = vmatpush1.bf16.msra.mxu0 0
  %674 = vmatprep.subr.bf16.mxu0 0
  %675 = vmatpush1.bf16.msra.mxu0 0
  %676 = vmatprep.subr.bf16.mxu0 0
  %677 = vmatpush1.bf16.msra.mxu0 0
  %678 = vmatprep.subr.bf16.mxu0 0
  %679 = vmatpush1.bf16.msra.mxu0 %v666
  %680 = vmatprep.subr.bf16.mxu0 0
  %681 = vmatpush1.bf16.msra.mxu0 %v665
  %682 = vmatprep.subr.bf16.mxu0 0
  %683 = vmatpush1.bf16.msra.mxu0 %v664
  %684 = vmatprep.subr.bf16.mxu0 0
  %685 = vmatpush1.bf16.msra.mxu0 %v663
  %686 = vmatprep.subr.bf16.mxu0 0
  %687 = vmatpush2.bf16.msra.mxu0 0
  %688 = vmatprep.subr.bf16.mxu0 0
  %689 = vmatpush2.bf16.msra.mxu0 0
  %690 = vmatprep.subr.bf16.mxu0 0
  %691 = vmatpush2.bf16.msra.mxu0 0
  %692 = vmatprep.subr.bf16.mxu0 0
  %693 = vmatpush2.bf16.msra.mxu0 0
  %694 = vmatprep.subr.bf16.mxu0 0
  %695 = vmatpush2.bf16.msra.mxu0 0
  %696 = vmatprep.subr.bf16.mxu0 0
  %697 = vmatpush2.bf16.msra.mxu0 0
  %698 = vmatprep.subr.bf16.mxu0 0
  %699 = vmatpush2.bf16.msra.mxu0 0
  %700 = vmatprep.subr.bf16.mxu0 0
  %701 = vmatpush2.bf16.msra.mxu0 0
  %702 = vmatprep.mubr.bf16.mxu0 0
  %703 = vmatmul.mubr.bf16.gmra.mxu0 %v668
  %v704 = vpop.f32.mrf.mxu0
  %v705 = vadd.f32 0.0, %v704
  %v706 = vpop.f32.mrf.mxu0
  %v707 = vpop.f32.mrf.mxu0
  %v708 = vpop.f32.mrf.mxu0
  %709 = vdwg.mxu0
  %v710 = vpack.c.bf16 %v705, %v705
  %v711 = vld [vmem:[%s14] sm:$0xf]
  %v712 = vld [vmem:[%s14 + $0x4] sm:$0xf]
  %v713 = vld [vmem:[%s14 + $0x8] sm:$0xf]
  %v714 = vld [vmem:[%s14 + $0xc] sm:$0xf]
  %v715 = vld [vmem:[%s14 + $0x10] sm:$0xf]
  %v716 = vld [vmem:[%s14 + $0x14] sm:$0xf]
  %v717 = vld [vmem:[%s14 + $0x18] sm:$0xf]
  %v718 = vld [vmem:[%s14 + $0x1c] sm:$0xf]
  %v719 = vld [vmem:[%s14 + $0x20] sm:$0xf]
  %v720 = vld [vmem:[%s14 + $0x24] sm:$0xf]
  %v721 = vld [vmem:[%s14 + $0x28] sm:$0xf]
  %v722 = vld [vmem:[%s14 + $0x2c] sm:$0xf]
  %v723 = vld [vmem:[%s14 + $0x30] sm:$0xf]
  %v724 = vld [vmem:[%s14 + $0x34] sm:$0xf]
  %v725 = vld [vmem:[%s14 + $0x38] sm:$0xf]
  %v726 = vld [vmem:[%s14 + $0x3c] sm:$0xf]
  %v727 = vld [vmem:[%s15] sm:$0x1]
  %v729 = vlaneseq
  %v730 = vshrl.u32 %v729, 7
  %v731 = vsub.s32 0, %v730
  %v732 = vrot.slane %v727, %v731
  %v750 = vunpack.c.l.b16 %v711
  %v751 = vunpack.c.l.b16 %v712
  %v752 = vunpack.c.l.b16 %v713
  %v753 = vunpack.c.l.b16 %v714
  %v754 = vunpack.c.l.b16 %v715
  %v755 = vunpack.c.l.b16 %v716
  %v756 = vunpack.c.l.b16 %v717
  %v757 = vunpack.c.l.b16 %v718
  %v758 = vunpack.c.l.b16 %v719
  %v759 = vunpack.c.l.b16 %v720
  %v760 = vunpack.c.l.b16 %v721
  %v761 = vunpack.c.l.b16 %v722
  %v762 = vunpack.c.l.b16 %v723
  %v763 = vunpack.c.l.b16 %v724
  %v764 = vunpack.c.l.b16 %v725
  %v765 = vunpack.c.l.b16 %v726
  %v766 = vpack.c.b16 %v751, %v750
  %v767 = vpack.c.b16 %v753, %v752
  %v768 = vpack.c.b16 %v755, %v754
  %v769 = vpack.c.b16 %v757, %v756
  %v770 = vpack.c.b16 %v759, %v758
  %v771 = vpack.c.b16 %v761, %v760
  %v772 = vpack.c.b16 %v763, %v762
  %v773 = vpack.c.b16 %v765, %v764
  %782 = vmatprep.subr.bf16.mxu0 0
  %783 = vmatpush1.bf16.msra.mxu0 %v773
  %784 = vmatprep.subr.bf16.mxu0 0
  %785 = vmatpush1.bf16.msra.mxu0 %v772
  %786 = vmatprep.subr.bf16.mxu0 0
  %787 = vmatpush1.bf16.msra.mxu0 %v771
  %788 = vmatprep.subr.bf16.mxu0 0
  %789 = vmatpush1.bf16.msra.mxu0 %v770
  %790 = vmatprep.subr.bf16.mxu0 0
  %791 = vmatpush1.bf16.msra.mxu0 %v769
  %792 = vmatprep.subr.bf16.mxu0 0
  %793 = vmatpush1.bf16.msra.mxu0 %v768
  %794 = vmatprep.subr.bf16.mxu0 0
  %795 = vmatpush1.bf16.msra.mxu0 %v767
  %796 = vmatprep.subr.bf16.mxu0 0
  %797 = vmatpush1.bf16.msra.mxu0 %v766
  %798 = vmatprep.subr.bf16.mxu0 0
  %799 = vmatpush2.bf16.msra.mxu0 0
  %800 = vmatprep.subr.bf16.mxu0 0
  %801 = vmatpush2.bf16.msra.mxu0 0
  %802 = vmatprep.subr.bf16.mxu0 0
  %803 = vmatpush2.bf16.msra.mxu0 0
  %804 = vmatprep.subr.bf16.mxu0 0
  %805 = vmatpush2.bf16.msra.mxu0 0
  %806 = vmatprep.subr.bf16.mxu0 0
  %807 = vmatpush2.bf16.msra.mxu0 0
  %808 = vmatprep.subr.bf16.mxu0 0
  %809 = vmatpush2.bf16.msra.mxu0 0
  %810 = vmatprep.subr.bf16.mxu0 0
  %811 = vmatpush2.bf16.msra.mxu0 0
  %812 = vmatprep.subr.bf16.mxu0 0
  %813 = vmatpush2.bf16.msra.mxu0 0
  %814 = vmatprep.mubr.bf16.mxu0 0
  %815 = vmatmul.mubr.bf16.gmra.mxu0 %v710
  %v816 = vpop.f32.mrf.mxu0
  %v817 = vadd.f32 %v732, %v816
  %v818 = vpop.f32.mrf.mxu0
  %v819 = vpop.f32.mrf.mxu0
  %v820 = vpop.f32.mrf.mxu0
  %821 = vdwg.mxu0
  %vm822 = vcmp.gt.f32.partialorder %v817, 0.0
  %v823 = vmul.f32 %v817, 0.01
  %v824 = vsel %vm822, %v817, %v823
  %v825 = vld [vmem:[%s3] sm:$0xff]
  %v826 = vld [vmem:[%s3 + $0x8] sm:$0xff]
  %v827 = vld [vmem:[%s3 + $0x10] sm:$0xff]
  %v828 = vld [vmem:[%s3 + $0x18] sm:$0xff]
  %v829 = vld [vmem:[%s3 + $0x20] sm:$0xff]
  %v830 = vld [vmem:[%s3 + $0x28] sm:$0xff]
  %v831 = vld [vmem:[%s3 + $0x30] sm:$0xff]
  %v832 = vld [vmem:[%s3 + $0x38] sm:$0xff]
  %v833 = vld [vmem:[%s3 + $0x40] sm:$0xff]
  %v834 = vld [vmem:[%s3 + $0x48] sm:$0xff]
  %v835 = vld [vmem:[%s3 + $0x50] sm:$0xff]
  %v836 = vld [vmem:[%s3 + $0x58] sm:$0xff]
  %v837 = vld [vmem:[%s3 + $0x60] sm:$0xff]
  %v838 = vld [vmem:[%s3 + $0x68] sm:$0xff]
  %v839 = vld [vmem:[%s3 + $0x70] sm:$0xff]
  %v840 = vld [vmem:[%s3 + $0x78] sm:$0xff]
  %v841 = vld [vmem:[%s4] sm:$0xf]
  %v842 = vld [vmem:[%s4 + $0x4] sm:$0xf]
  %v843 = vld [vmem:[%s4 + $0x8] sm:$0xf]
  %v844 = vld [vmem:[%s4 + $0xc] sm:$0xf]
  %v845 = vld [vmem:[%s4 + $0x10] sm:$0xf]
  %v846 = vld [vmem:[%s4 + $0x14] sm:$0xf]
  %v847 = vld [vmem:[%s4 + $0x18] sm:$0xf]
  %v848 = vld [vmem:[%s4 + $0x1c] sm:$0xf]
  %v849 = vld [vmem:[%s10] sm:$0xf]
  %v850 = vld [vmem:[%s10 + $0x4] sm:$0xf]
  %v851 = vld [vmem:[%s10 + $0x8] sm:$0xf]
  %v852 = vld [vmem:[%s10 + $0xc] sm:$0xf]
  %v853 = vld [vmem:[%s10 + $0x10] sm:$0xf]
  %v854 = vld [vmem:[%s10 + $0x14] sm:$0xf]
  %v855 = vld [vmem:[%s10 + $0x18] sm:$0xf]
  %v856 = vld [vmem:[%s10 + $0x1c] sm:$0xf]
  %v857 = vld [vmem:[%s10 + $0x20] sm:$0xf]
  %v858 = vld [vmem:[%s10 + $0x24] sm:$0xf]
  %v859 = vld [vmem:[%s10 + $0x28] sm:$0xf]
  %v860 = vld [vmem:[%s10 + $0x2c] sm:$0xf]
  %v861 = vld [vmem:[%s10 + $0x30] sm:$0xf]
  %v862 = vld [vmem:[%s10 + $0x34] sm:$0xf]
  %v863 = vld [vmem:[%s10 + $0x38] sm:$0xf]
  %v864 = vld [vmem:[%s10 + $0x3c] sm:$0xf]
  %v865 = vld [vmem:[%s10 + $0x40] sm:$0xf]
  %v866 = vld [vmem:[%s10 + $0x44] sm:$0xf]
  %v867 = vld [vmem:[%s10 + $0x48] sm:$0xf]
  %v868 = vld [vmem:[%s10 + $0x4c] sm:$0xf]
  %v869 = vld [vmem:[%s10 + $0x50] sm:$0xf]
  %v870 = vld [vmem:[%s10 + $0x54] sm:$0xf]
  %v871 = vld [vmem:[%s10 + $0x58] sm:$0xf]
  %v872 = vld [vmem:[%s10 + $0x5c] sm:$0xf]
  %v873 = vld [vmem:[%s10 + $0x60] sm:$0xf]
  %v874 = vld [vmem:[%s10 + $0x64] sm:$0xf]
  %v875 = vld [vmem:[%s10 + $0x68] sm:$0xf]
  %v876 = vld [vmem:[%s10 + $0x6c] sm:$0xf]
  %v877 = vld [vmem:[%s10 + $0x70] sm:$0xf]
  %v878 = vld [vmem:[%s10 + $0x74] sm:$0xf]
  %v879 = vld [vmem:[%s10 + $0x78] sm:$0xf]
  %v880 = vld [vmem:[%s10 + $0x7c] sm:$0xf]
  %v881 = vld [vmem:[%s11] sm:$0x1]
  %v882 = vld [vmem:[%s12] sm:$0x1]
  %v883 = vld [vmem:[%s13] sm:$0x1]
  %v884 = vpack.c.bf16 %v827, %v825
  %v885 = vpack.c.bf16 %v828, %v826
  %v886 = vpack.c.bf16 %v831, %v829
  %v887 = vpack.c.bf16 %v832, %v830
  %v888 = vpack.c.bf16 %v835, %v833
  %v889 = vpack.c.bf16 %v836, %v834
  %v890 = vpack.c.bf16 %v839, %v837
  %v891 = vpack.c.bf16 %v840, %v838
  %v924 = vunpack.c.l.b16 %v849
  %v925 = vunpack.c.l.b16 %v850
  %v926 = vunpack.c.l.b16 %v851
  %v927 = vunpack.c.l.b16 %v852
  %v928 = vunpack.c.l.b16 %v853
  %v929 = vunpack.c.l.b16 %v854
  %v930 = vunpack.c.l.b16 %v855
  %v931 = vunpack.c.l.b16 %v856
  %v932 = vunpack.c.l.b16 %v857
  %v933 = vunpack.c.l.b16 %v858
  %v934 = vunpack.c.l.b16 %v859
  %v935 = vunpack.c.l.b16 %v860
  %v936 = vunpack.c.l.b16 %v861
  %v937 = vunpack.c.l.b16 %v862
  %v938 = vunpack.c.l.b16 %v863
  %v939 = vunpack.c.l.b16 %v864
  %v940 = vunpack.c.l.b16 %v865
  %v941 = vunpack.c.l.b16 %v866
  %v942 = vunpack.c.l.b16 %v867
  %v943 = vunpack.c.l.b16 %v868
  %v944 = vunpack.c.l.b16 %v869
  %v945 = vunpack.c.l.b16 %v870
  %v946 = vunpack.c.l.b16 %v871
  %v947 = vunpack.c.l.b16 %v872
  %v948 = vunpack.c.l.b16 %v873
  %v949 = vunpack.c.l.b16 %v874
  %v950 = vunpack.c.l.b16 %v875
  %v951 = vunpack.c.l.b16 %v876
  %v952 = vunpack.c.l.b16 %v877
  %v953 = vunpack.c.l.b16 %v878
  %v954 = vunpack.c.l.b16 %v879
  %v955 = vunpack.c.l.b16 %v880
  %v956 = vpack.c.b16 %v925, %v924
  %v957 = vpack.c.b16 %v927, %v926
  %v958 = vpack.c.b16 %v929, %v928
  %v959 = vpack.c.b16 %v931, %v930
  %v960 = vpack.c.b16 %v933, %v932
  %v961 = vpack.c.b16 %v935, %v934
  %v962 = vpack.c.b16 %v937, %v936
  %v963 = vpack.c.b16 %v939, %v938
  %v964 = vpack.c.b16 %v941, %v940
  %v965 = vpack.c.b16 %v943, %v942
  %v966 = vpack.c.b16 %v945, %v944
  %v967 = vpack.c.b16 %v947, %v946
  %v968 = vpack.c.b16 %v949, %v948
  %v969 = vpack.c.b16 %v951, %v950
  %v970 = vpack.c.b16 %v953, %v952
  %v971 = vpack.c.b16 %v955, %v954
  %988 = vmatprep.subr.bf16.mxu0 0
  %989 = vmatpush1.bf16.msra.mxu0 %v963
  %990 = vmatprep.subr.bf16.mxu0 0
  %991 = vmatpush1.bf16.msra.mxu0 %v962
  %992 = vmatprep.subr.bf16.mxu0 0
  %993 = vmatpush1.bf16.msra.mxu0 %v961
  %994 = vmatprep.subr.bf16.mxu0 0
  %995 = vmatpush1.bf16.msra.mxu0 %v960
  %996 = vmatprep.subr.bf16.mxu0 0
  %997 = vmatpush1.bf16.msra.mxu0 %v959
  %998 = vmatprep.subr.bf16.mxu0 0
  %999 = vmatpush1.bf16.msra.mxu0 %v958
  %1000 = vmatprep.subr.bf16.mxu0 0
  %1001 = vmatpush1.bf16.msra.mxu0 %v957
  %1002 = vmatprep.subr.bf16.mxu0 0
  %1003 = vmatpush1.bf16.msra.mxu0 %v956
  %1004 = vmatprep.subr.bf16.mxu0 0
  %1005 = vmatpush2.bf16.msra.mxu0 %v971
  %1006 = vmatprep.subr.bf16.mxu0 0
  %1007 = vmatpush2.bf16.msra.mxu0 %v970
  %1008 = vmatprep.subr.bf16.mxu0 0
  %1009 = vmatpush2.bf16.msra.mxu0 %v969
  %1010 = vmatprep.subr.bf16.mxu0 0
  %1011 = vmatpush2.bf16.msra.mxu0 %v968
  %1012 = vmatprep.subr.bf16.mxu0 0
  %1013 = vmatpush2.bf16.msra.mxu0 %v967
  %1014 = vmatprep.subr.bf16.mxu0 0
  %1015 = vmatpush2.bf16.msra.mxu0 %v966
  %1016 = vmatprep.subr.bf16.mxu0 0
  %1017 = vmatpush2.bf16.msra.mxu0 %v965
  %1018 = vmatprep.subr.bf16.mxu0 0
  %1019 = vmatpush2.bf16.msra.mxu0 %v964
  %1020 = vmatprep.mubr.bf16.mxu0 %v885
  %1021 = vmatmul.mubr.bf16.gmra.mxu0 %v884
  %v1022 = vpop.f32.mrf.mxu0
  %v1023 = vadd.f32 0.0, %v1022
  %v1024 = vpop.f32.mrf.mxu0
  %v1025 = vpop.f32.mrf.mxu0
  %v1026 = vadd.f32 0.0, %v1025
  %v1027 = vpop.f32.mrf.mxu0
  %1028 = vmatprep.mubr.bf16.mxu0 %v887
  %1029 = vmatmul.mubr.bf16.gmra.mxu0 %v886
  %v1030 = vpop.f32.mrf.mxu0
  %v1031 = vadd.f32 0.0, %v1030
  %v1032 = vpop.f32.mrf.mxu0
  %v1033 = vpop.f32.mrf.mxu0
  %v1034 = vadd.f32 0.0, %v1033
  %v1035 = vpop.f32.mrf.mxu0
  %1036 = vmatprep.mubr.bf16.mxu0 %v889
  %1037 = vmatmul.mubr.bf16.gmra.mxu0 %v888
  %v1038 = vpop.f32.mrf.mxu0
  %v1039 = vadd.f32 0.0, %v1038
  %v1040 = vpop.f32.mrf.mxu0
  %v1041 = vpop.f32.mrf.mxu0
  %v1042 = vadd.f32 0.0, %v1041
  %v1043 = vpop.f32.mrf.mxu0
  %1044 = vmatprep.mubr.bf16.mxu0 %v891
  %1045 = vmatmul.mubr.bf16.gmra.mxu0 %v890
  %v1046 = vpop.f32.mrf.mxu0
  %v1047 = vadd.f32 0.0, %v1046
  %v1048 = vpop.f32.mrf.mxu0
  %v1049 = vpop.f32.mrf.mxu0
  %v1050 = vadd.f32 0.0, %v1049
  %v1051 = vpop.f32.mrf.mxu0
  %1052 = vdwg.mxu0
  %v1053 = vpack.c.bf16 %v1026, %v1023
  %v1054 = vpack.c.bf16 %v1034, %v1031
  %v1055 = vpack.c.bf16 %v1042, %v1039
  %v1056 = vpack.c.bf16 %v1050, %v1047
  %v1058 = vlaneseq
  %v1059 = vshrl.u32 %v1058, 7
  %v1060 = vsub.s32 0, %v1059
  %v1061 = vrot.slane %v882, %v1060
  %v1063 = vmul.f32 %v1023, %v1061
  %v1064 = vmul.f32 %v1026, %v1061
  %v1065 = vmul.f32 %v1031, %v1061
  %v1066 = vmul.f32 %v1034, %v1061
  %v1067 = vmul.f32 %v1039, %v1061
  %v1068 = vmul.f32 %v1042, %v1061
  %v1069 = vmul.f32 %v1047, %v1061
  %v1070 = vmul.f32 %v1050, %v1061
  %1071 = vadd.xlane.f32.xlu0 %v1063
  %v1072 = vpop.xlane.xlu0 %1071
  %1073 = vadd.xlane.f32.xlu0 %v1064
  %v1074 = vpop.xlane.xlu0 %1073
  %1075 = vadd.xlane.f32.xlu0 %v1065
  %v1076 = vpop.xlane.xlu0 %1075
  %1077 = vadd.xlane.f32.xlu0 %v1066
  %v1078 = vpop.xlane.xlu0 %1077
  %1079 = vadd.xlane.f32.xlu0 %v1067
  %v1080 = vpop.xlane.xlu0 %1079
  %1081 = vadd.xlane.f32.xlu0 %v1068
  %v1082 = vpop.xlane.xlu0 %1081
  %1083 = vadd.xlane.f32.xlu0 %v1069
  %v1084 = vpop.xlane.xlu0 %1083
  %1085 = vadd.xlane.f32.xlu0 %v1070
  %v1086 = vpop.xlane.xlu0 %1085
  %v1087 = vpack.c.bf16 %v881, %v881
  %1088 = vmatprep.subr.bf16.mxu0 0
  %1089 = vmatpush1.bf16.xpose.msra.mxu0 0
  %1090 = vmatprep.subr.bf16.mxu0 0
  %1091 = vmatpush1.bf16.xpose.msra.mxu0 0
  %1092 = vmatprep.subr.bf16.mxu0 0
  %1093 = vmatpush1.bf16.xpose.msra.mxu0 0
  %1094 = vmatprep.subr.bf16.mxu0 0
  %1095 = vmatpush1.bf16.xpose.msra.mxu0 0
  %1096 = vmatprep.subr.bf16.mxu0 0
  %1097 = vmatpush1.bf16.xpose.msra.mxu0 %v1056
  %1098 = vmatprep.subr.bf16.mxu0 0
  %1099 = vmatpush1.bf16.xpose.msra.mxu0 %v1055
  %1100 = vmatprep.subr.bf16.mxu0 0
  %1101 = vmatpush1.bf16.xpose.msra.mxu0 %v1054
  %1102 = vmatprep.subr.bf16.mxu0 0
  %1103 = vmatpush1.bf16.xpose.msra.mxu0 %v1053
  %1104 = vmatprep.subr.bf16.mxu0 0
  %1105 = vmatpush2.bf16.xpose.msra.mxu0 0
  %1106 = vmatprep.subr.bf16.mxu0 0
  %1107 = vmatpush2.bf16.xpose.msra.mxu0 0
  %1108 = vmatprep.subr.bf16.mxu0 0
  %1109 = vmatpush2.bf16.xpose.msra.mxu0 0
  %1110 = vmatprep.subr.bf16.mxu0 0
  %1111 = vmatpush2.bf16.xpose.msra.mxu0 0
  %1112 = vmatprep.subr.bf16.mxu0 0
  %1113 = vmatpush2.bf16.xpose.msra.mxu0 0
  %1114 = vmatprep.subr.bf16.mxu0 0
  %1115 = vmatpush2.bf16.xpose.msra.mxu0 0
  %1116 = vmatprep.subr.bf16.mxu0 0
  %1117 = vmatpush2.bf16.xpose.msra.mxu0 0
  %1118 = vmatprep.subr.bf16.mxu0 0
  %1119 = vmatpush2.bf16.xpose.msra.mxu0 0
  %1120 = vmatprep.mubr.bf16.mxu0 0
  %1121 = vmatmul.mubr.bf16.gmra.mxu0 %v1087
  %v1122 = vpop.f32.mrf.mxu0
  %v1123 = vadd.f32 0.0, %v1122
  %v1124 = vpop.f32.mrf.mxu0
  %v1125 = vpop.f32.mrf.mxu0
  %v1126 = vpop.f32.mrf.mxu0
  %1127 = vdwg.mxu0
  %v1128 = vlaneseq
  %v1129 = vshrl.u32 %v1128, 7
  %v1130 = vsub.s32 0, %v1129
  %v1131 = vrot.slane %v1123, %v1130
  %v1132 = vadd.f32 %v1072, %v1131
  %v1133 = vadd.f32 %v1074, %v1131
  %v1134 = vadd.f32 %v1076, %v1131
  %v1135 = vadd.f32 %v1078, %v1131
  %v1136 = vadd.f32 %v1080, %v1131
  %v1137 = vadd.f32 %v1082, %v1131
  %v1138 = vadd.f32 %v1084, %v1131
  %v1139 = vadd.f32 %v1086, %v1131
  %vm1140 = vcmp.gt.f32.partialorder %v1132, 0.0
  %vm1141 = vcmp.gt.f32.partialorder %v1133, 0.0
  %vm1142 = vcmp.gt.f32.partialorder %v1134, 0.0
  %vm1143 = vcmp.gt.f32.partialorder %v1135, 0.0
  %vm1144 = vcmp.gt.f32.partialorder %v1136, 0.0
  %vm1145 = vcmp.gt.f32.partialorder %v1137, 0.0
  %vm1146 = vcmp.gt.f32.partialorder %v1138, 0.0
  %vm1147 = vcmp.gt.f32.partialorder %v1139, 0.0
  %v1148 = vmul.f32 %v1132, 0.2
  %v1149 = vmul.f32 %v1133, 0.2
  %v1150 = vmul.f32 %v1134, 0.2
  %v1151 = vmul.f32 %v1135, 0.2
  %v1152 = vmul.f32 %v1136, 0.2
  %v1153 = vmul.f32 %v1137, 0.2
  %v1154 = vmul.f32 %v1138, 0.2
  %v1155 = vmul.f32 %v1139, 0.2
  %v1156 = vsel %vm1140, %v1132, %v1148
  %v1157 = vsel %vm1141, %v1133, %v1149
  %v1158 = vsel %vm1142, %v1134, %v1150
  %v1159 = vsel %vm1143, %v1135, %v1151
  %v1160 = vsel %vm1144, %v1136, %v1152
  %v1161 = vsel %vm1145, %v1137, %v1153
  %v1162 = vsel %vm1146, %v1138, %v1154
  %v1163 = vsel %vm1147, %v1139, %v1155
  %vm1164 = vcmp.gt.bf16.partialorder %v841, 0
  %vm1165 = vcmp.gt.bf16.partialorder %v842, 0
  %vm1166 = vcmp.gt.bf16.partialorder %v843, 0
  %vm1167 = vcmp.gt.bf16.partialorder %v844, 0
  %vm1168 = vcmp.gt.bf16.partialorder %v845, 0
  %vm1169 = vcmp.gt.bf16.partialorder %v846, 0
  %vm1170 = vcmp.gt.bf16.partialorder %v847, 0
  %vm1171 = vcmp.gt.bf16.partialorder %v848, 0
  %v1172 = vsel %vm1164, 65537, 0
  %v1173 = vsel %vm1165, 65537, 0
  %v1174 = vsel %vm1166, 65537, 0
  %v1175 = vsel %vm1167, 65537, 0
  %v1176 = vsel %vm1168, 65537, 0
  %v1177 = vsel %vm1169, 65537, 0
  %v1178 = vsel %vm1170, 65537, 0
  %v1179 = vsel %vm1171, 65537, 0
  %v1180 = vunpack.c.l.b16 %v1172
  %v1181 = vunpack.c.l.b16 %v1173
  %v1182 = vunpack.c.l.b16 %v1174
  %v1183 = vunpack.c.l.b16 %v1175
  %v1184 = vunpack.c.l.b16 %v1176
  %v1185 = vunpack.c.l.b16 %v1177
  %v1186 = vunpack.c.l.b16 %v1178
  %v1187 = vunpack.c.l.b16 %v1179
  %vm1188 = vcmp.ne.s32.totalorder %v1180, 0
  %vm1189 = vcmp.ne.s32.totalorder %v1181, 0
  %vm1190 = vcmp.ne.s32.totalorder %v1182, 0
  %vm1191 = vcmp.ne.s32.totalorder %v1183, 0
  %vm1192 = vcmp.ne.s32.totalorder %v1184, 0
  %vm1193 = vcmp.ne.s32.totalorder %v1185, 0
  %vm1194 = vcmp.ne.s32.totalorder %v1186, 0
  %vm1195 = vcmp.ne.s32.totalorder %v1187, 0
  %v1196 = vsel %vm1188, %v1156, -1e+30
  %v1197 = vsel %vm1189, %v1157, -1e+30
  %v1198 = vsel %vm1190, %v1158, -1e+30
  %v1199 = vsel %vm1191, %v1159, -1e+30
  %v1200 = vsel %vm1192, %v1160, -1e+30
  %v1201 = vsel %vm1193, %v1161, -1e+30
  %v1202 = vsel %vm1194, %v1162, -1e+30
  %v1203 = vsel %vm1195, %v1163, -1e+30
  %v1204 = vsel %vm462, %v1196, -inf
  %1205 = vmax.xlane.f32.xlu0 %v1204
  %v1206 = vpop.xlane.xlu0 %1205
  %v1207 = vsel %vm462, %v1197, -inf
  %1208 = vmax.xlane.f32.xlu0 %v1207
  %v1209 = vpop.xlane.xlu0 %1208
  %v1210 = vsel %vm462, %v1198, -inf
  %1211 = vmax.xlane.f32.xlu0 %v1210
  %v1212 = vpop.xlane.xlu0 %1211
  %v1213 = vsel %vm462, %v1199, -inf
  %1214 = vmax.xlane.f32.xlu0 %v1213
  %v1215 = vpop.xlane.xlu0 %1214
  %v1216 = vsel %vm462, %v1200, -inf
  %1217 = vmax.xlane.f32.xlu0 %v1216
  %v1218 = vpop.xlane.xlu0 %1217
  %v1219 = vsel %vm462, %v1201, -inf
  %1220 = vmax.xlane.f32.xlu0 %v1219
  %v1221 = vpop.xlane.xlu0 %1220
  %v1222 = vsel %vm462, %v1202, -inf
  %1223 = vmax.xlane.f32.xlu0 %v1222
  %v1224 = vpop.xlane.xlu0 %1223
  %v1225 = vsel %vm462, %v1203, -inf
  %1226 = vmax.xlane.f32.xlu0 %v1225
  %v1227 = vpop.xlane.xlu0 %1226
  %v1228 = vsub.f32 %v1196, %v1206
  %v1229 = vsub.f32 %v1197, %v1209
  %v1230 = vsub.f32 %v1198, %v1212
  %v1231 = vsub.f32 %v1199, %v1215
  %v1232 = vsub.f32 %v1200, %v1218
  %v1233 = vsub.f32 %v1201, %v1221
  %v1234 = vsub.f32 %v1202, %v1224
  %v1235 = vsub.f32 %v1203, %v1227
  %v1236 = vmul.f32 %v1228, 1.442695
  %v1237 = vpow.pop %v1236
  %v1238 = vmul.f32 %v1229, 1.442695
  %v1239 = vpow.pop %v1238
  %v1240 = vmul.f32 %v1230, 1.442695
  %v1241 = vpow.pop %v1240
  %v1242 = vmul.f32 %v1231, 1.442695
  %v1243 = vpow.pop %v1242
  %v1244 = vmul.f32 %v1232, 1.442695
  %v1245 = vpow.pop %v1244
  %v1246 = vmul.f32 %v1233, 1.442695
  %v1247 = vpow.pop %v1246
  %v1248 = vmul.f32 %v1234, 1.442695
  %v1249 = vpow.pop %v1248
  %v1250 = vmul.f32 %v1235, 1.442695
  %v1251 = vpow.pop %v1250
  %v1252 = vsel %vm462, %v1237, 0.0
  %1253 = vadd.xlane.f32.xlu0 %v1252
  %v1254 = vpop.xlane.xlu0 %1253
  %v1255 = vsel %vm462, %v1239, 0.0
  %1256 = vadd.xlane.f32.xlu0 %v1255
  %v1257 = vpop.xlane.xlu0 %1256
  %v1258 = vsel %vm462, %v1241, 0.0
  %1259 = vadd.xlane.f32.xlu0 %v1258
  %v1260 = vpop.xlane.xlu0 %1259
  %v1261 = vsel %vm462, %v1243, 0.0
  %1262 = vadd.xlane.f32.xlu0 %v1261
  %v1263 = vpop.xlane.xlu0 %1262
  %v1264 = vsel %vm462, %v1245, 0.0
  %1265 = vadd.xlane.f32.xlu0 %v1264
  %v1266 = vpop.xlane.xlu0 %1265
  %v1267 = vsel %vm462, %v1247, 0.0
  %1268 = vadd.xlane.f32.xlu0 %v1267
  %v1269 = vpop.xlane.xlu0 %1268
  %v1270 = vsel %vm462, %v1249, 0.0
  %1271 = vadd.xlane.f32.xlu0 %v1270
  %v1272 = vpop.xlane.xlu0 %1271
  %v1273 = vsel %vm462, %v1251, 0.0
  %1274 = vadd.xlane.f32.xlu0 %v1273
  %v1275 = vpop.xlane.xlu0 %1274
  %v1276 = vrcp.pop %v1254
  %v1277 = vmul.f32 %v1237, %v1276
  %v1278 = vrcp.pop %v1257
  %v1279 = vmul.f32 %v1239, %v1278
  %v1280 = vrcp.pop %v1260
  %v1281 = vmul.f32 %v1241, %v1280
  %v1282 = vrcp.pop %v1263
  %v1283 = vmul.f32 %v1243, %v1282
  %v1284 = vrcp.pop %v1266
  %v1285 = vmul.f32 %v1245, %v1284
  %v1286 = vrcp.pop %v1269
  %v1287 = vmul.f32 %v1247, %v1286
  %v1288 = vrcp.pop %v1272
  %v1289 = vmul.f32 %v1249, %v1288
  %v1290 = vrcp.pop %v1275
  %v1291 = vmul.f32 %v1251, %v1290
  %v1292 = vpack.c.bf16 %v1279, %v1277
  %v1293 = vpack.c.bf16 %v1283, %v1281
  %v1294 = vpack.c.bf16 %v1287, %v1285
  %v1295 = vpack.c.bf16 %v1291, %v1289
  %v1297 = vlaneseq
  %v1298 = vshrl.u32 %v1297, 7
  %v1299 = vsub.s32 0, %v1298
  %v1300 = vrot.slane %v883, %v1299
  %v1303 = vsel %vm462, %v1292, 0
  %v1306 = vsel %vm462, %v1293, 0
  %v1309 = vsel %vm462, %v1294, 0
  %v1312 = vsel %vm462, %v1295, 0
  %1314 = vmatprep.subr.bf16.mxu0 0
  %1315 = vmatpush1.bf16.msra.mxu0 0
  %1316 = vmatprep.subr.bf16.mxu0 0
  %1317 = vmatpush1.bf16.msra.mxu0 0
  %1318 = vmatprep.subr.bf16.mxu0 0
  %1319 = vmatpush1.bf16.msra.mxu0 0
  %1320 = vmatprep.subr.bf16.mxu0 0
  %1321 = vmatpush1.bf16.msra.mxu0 0
  %1322 = vmatprep.subr.bf16.mxu0 0
  %1323 = vmatpush1.bf16.msra.mxu0 %v1056
  %1324 = vmatprep.subr.bf16.mxu0 0
  %1325 = vmatpush1.bf16.msra.mxu0 %v1055
  %1326 = vmatprep.subr.bf16.mxu0 0
  %1327 = vmatpush1.bf16.msra.mxu0 %v1054
  %1328 = vmatprep.subr.bf16.mxu0 0
  %1329 = vmatpush1.bf16.msra.mxu0 %v1053
  %1330 = vmatprep.subr.bf16.mxu0 0
  %1331 = vmatpush2.bf16.msra.mxu0 0
  %1332 = vmatprep.subr.bf16.mxu0 0
  %1333 = vmatpush2.bf16.msra.mxu0 0
  %1334 = vmatprep.subr.bf16.mxu0 0
  %1335 = vmatpush2.bf16.msra.mxu0 0
  %1336 = vmatprep.subr.bf16.mxu0 0
  %1337 = vmatpush2.bf16.msra.mxu0 0
  %1338 = vmatprep.subr.bf16.mxu0 0
  %1339 = vmatpush2.bf16.msra.mxu0 0
  %1340 = vmatprep.subr.bf16.mxu0 0
  %1341 = vmatpush2.bf16.msra.mxu0 0
  %1342 = vmatprep.subr.bf16.mxu0 0
  %1343 = vmatpush2.bf16.msra.mxu0 0
  %1344 = vmatprep.subr.bf16.mxu0 0
  %1345 = vmatpush2.bf16.msra.mxu0 0
  %1346 = vmatprep.mubr.bf16.mxu0 0
  %1347 = vmatmul.mubr.bf16.gmra.mxu0 %v1303
  %v1348 = vpop.f32.mrf.mxu0
  %v1349 = vadd.f32 %v1300, %v1348
  %v1350 = vpop.f32.mrf.mxu0
  %v1351 = vpop.f32.mrf.mxu0
  %v1352 = vadd.f32 %v1300, %v1351
  %v1353 = vpop.f32.mrf.mxu0
  %1354 = vmatprep.mubr.bf16.mxu0 0
  %1355 = vmatmul.mubr.bf16.gmra.mxu0 %v1306
  %v1356 = vpop.f32.mrf.mxu0
  %v1357 = vadd.f32 %v1300, %v1356
  %v1358 = vpop.f32.mrf.mxu0
  %v1359 = vpop.f32.mrf.mxu0
  %v1360 = vadd.f32 %v1300, %v1359
  %v1361 = vpop.f32.mrf.mxu0
  %1362 = vmatprep.mubr.bf16.mxu0 0
  %1363 = vmatmul.mubr.bf16.gmra.mxu0 %v1309
  %v1364 = vpop.f32.mrf.mxu0
  %v1365 = vadd.f32 %v1300, %v1364
  %v1366 = vpop.f32.mrf.mxu0
  %v1367 = vpop.f32.mrf.mxu0
  %v1368 = vadd.f32 %v1300, %v1367
  %v1369 = vpop.f32.mrf.mxu0
  %1370 = vmatprep.mubr.bf16.mxu0 0
  %1371 = vmatmul.mubr.bf16.gmra.mxu0 %v1312
  %v1372 = vpop.f32.mrf.mxu0
  %v1373 = vadd.f32 %v1300, %v1372
  %v1374 = vpop.f32.mrf.mxu0
  %v1375 = vpop.f32.mrf.mxu0
  %v1376 = vadd.f32 %v1300, %v1375
  %v1377 = vpop.f32.mrf.mxu0
  %1378 = vdwg.mxu0
  %v1379 = vpack.c.bf16 %v1352, %v1349
  %v1380 = vpack.c.bf16 %v1360, %v1357
  %v1381 = vpack.c.bf16 %v1368, %v1365
  %v1382 = vpack.c.bf16 %v1376, %v1373
  %v1383 = vld [vmem:[%s16] sm:$0xf]
  %v1384 = vld [vmem:[%s16 + $0x4] sm:$0xf]
  %v1385 = vld [vmem:[%s16 + $0x8] sm:$0xf]
  %v1386 = vld [vmem:[%s16 + $0xc] sm:$0xf]
  %v1387 = vld [vmem:[%s16 + $0x10] sm:$0xf]
  %v1388 = vld [vmem:[%s16 + $0x14] sm:$0xf]
  %v1389 = vld [vmem:[%s16 + $0x18] sm:$0xf]
  %v1390 = vld [vmem:[%s16 + $0x1c] sm:$0xf]
  %v1391 = vld [vmem:[%s16 + $0x20] sm:$0xf]
  %v1392 = vld [vmem:[%s16 + $0x24] sm:$0xf]
  %v1393 = vld [vmem:[%s16 + $0x28] sm:$0xf]
  %v1394 = vld [vmem:[%s16 + $0x2c] sm:$0xf]
  %v1395 = vld [vmem:[%s16 + $0x30] sm:$0xf]
  %v1396 = vld [vmem:[%s16 + $0x34] sm:$0xf]
  %v1397 = vld [vmem:[%s16 + $0x38] sm:$0xf]
  %v1398 = vld [vmem:[%s16 + $0x3c] sm:$0xf]
  %v1399 = vld [vmem:[%s17] sm:$0x1]
  %v1401 = vlaneseq
  %v1402 = vshrl.u32 %v1401, 7
  %v1403 = vsub.s32 0, %v1402
  %v1404 = vrot.slane %v1399, %v1403
  %v1422 = vunpack.c.l.b16 %v1383
  %v1423 = vunpack.c.l.b16 %v1384
  %v1424 = vunpack.c.l.b16 %v1385
  %v1425 = vunpack.c.l.b16 %v1386
  %v1426 = vunpack.c.l.b16 %v1387
  %v1427 = vunpack.c.l.b16 %v1388
  %v1428 = vunpack.c.l.b16 %v1389
  %v1429 = vunpack.c.l.b16 %v1390
  %v1430 = vunpack.c.l.b16 %v1391
  %v1431 = vunpack.c.l.b16 %v1392
  %v1432 = vunpack.c.l.b16 %v1393
  %v1433 = vunpack.c.l.b16 %v1394
  %v1434 = vunpack.c.l.b16 %v1395
  %v1435 = vunpack.c.l.b16 %v1396
  %v1436 = vunpack.c.l.b16 %v1397
  %v1437 = vunpack.c.l.b16 %v1398
  %v1438 = vpack.c.b16 %v1423, %v1422
  %v1439 = vpack.c.b16 %v1425, %v1424
  %v1440 = vpack.c.b16 %v1427, %v1426
  %v1441 = vpack.c.b16 %v1429, %v1428
  %v1442 = vpack.c.b16 %v1431, %v1430
  %v1443 = vpack.c.b16 %v1433, %v1432
  %v1444 = vpack.c.b16 %v1435, %v1434
  %v1445 = vpack.c.b16 %v1437, %v1436
  %1454 = vmatprep.subr.bf16.mxu0 0
  %1455 = vmatpush1.bf16.msra.mxu0 %v1445
  %1456 = vmatprep.subr.bf16.mxu0 0
  %1457 = vmatpush1.bf16.msra.mxu0 %v1444
  %1458 = vmatprep.subr.bf16.mxu0 0
  %1459 = vmatpush1.bf16.msra.mxu0 %v1443
  %1460 = vmatprep.subr.bf16.mxu0 0
  %1461 = vmatpush1.bf16.msra.mxu0 %v1442
  %1462 = vmatprep.subr.bf16.mxu0 0
  %1463 = vmatpush1.bf16.msra.mxu0 %v1441
  %1464 = vmatprep.subr.bf16.mxu0 0
  %1465 = vmatpush1.bf16.msra.mxu0 %v1440
  %1466 = vmatprep.subr.bf16.mxu0 0
  %1467 = vmatpush1.bf16.msra.mxu0 %v1439
  %1468 = vmatprep.subr.bf16.mxu0 0
  %1469 = vmatpush1.bf16.msra.mxu0 %v1438
  %1470 = vmatprep.subr.bf16.mxu0 0
  %1471 = vmatpush2.bf16.msra.mxu0 0
  %1472 = vmatprep.subr.bf16.mxu0 0
  %1473 = vmatpush2.bf16.msra.mxu0 0
  %1474 = vmatprep.subr.bf16.mxu0 0
  %1475 = vmatpush2.bf16.msra.mxu0 0
  %1476 = vmatprep.subr.bf16.mxu0 0
  %1477 = vmatpush2.bf16.msra.mxu0 0
  %1478 = vmatprep.subr.bf16.mxu0 0
  %1479 = vmatpush2.bf16.msra.mxu0 0
  %1480 = vmatprep.subr.bf16.mxu0 0
  %1481 = vmatpush2.bf16.msra.mxu0 0
  %1482 = vmatprep.subr.bf16.mxu0 0
  %1483 = vmatpush2.bf16.msra.mxu0 0
  %1484 = vmatprep.subr.bf16.mxu0 0
  %1485 = vmatpush2.bf16.msra.mxu0 0
  %1486 = vmatprep.mubr.bf16.mxu0 0
  %1487 = vmatmul.mubr.bf16.gmra.mxu0 %v1379
  %v1488 = vpop.f32.mrf.mxu0
  %v1489 = vadd.f32 %v1404, %v1488
  %v1490 = vpop.f32.mrf.mxu0
  %v1491 = vpop.f32.mrf.mxu0
  %v1492 = vadd.f32 %v1404, %v1491
  %v1493 = vpop.f32.mrf.mxu0
  %1494 = vmatprep.mubr.bf16.mxu0 0
  %1495 = vmatmul.mubr.bf16.gmra.mxu0 %v1380
  %v1496 = vpop.f32.mrf.mxu0
  %v1497 = vadd.f32 %v1404, %v1496
  %v1498 = vpop.f32.mrf.mxu0
  %v1499 = vpop.f32.mrf.mxu0
  %v1500 = vadd.f32 %v1404, %v1499
  %v1501 = vpop.f32.mrf.mxu0
  %1502 = vmatprep.mubr.bf16.mxu0 0
  %1503 = vmatmul.mubr.bf16.gmra.mxu0 %v1381
  %v1504 = vpop.f32.mrf.mxu0
  %v1505 = vadd.f32 %v1404, %v1504
  %v1506 = vpop.f32.mrf.mxu0
  %v1507 = vpop.f32.mrf.mxu0
  %v1508 = vadd.f32 %v1404, %v1507
  %v1509 = vpop.f32.mrf.mxu0
  %1510 = vmatprep.mubr.bf16.mxu0 0
  %1511 = vmatmul.mubr.bf16.gmra.mxu0 %v1382
  %v1512 = vpop.f32.mrf.mxu0
  %v1513 = vadd.f32 %v1404, %v1512
  %v1514 = vpop.f32.mrf.mxu0
  %v1515 = vpop.f32.mrf.mxu0
  %v1516 = vadd.f32 %v1404, %v1515
  %v1517 = vpop.f32.mrf.mxu0
  %1518 = vdwg.mxu0
  %vm1519 = vcmp.gt.f32.partialorder %v1489, 0.0
  %vm1520 = vcmp.gt.f32.partialorder %v1492, 0.0
  %vm1521 = vcmp.gt.f32.partialorder %v1497, 0.0
  %vm1522 = vcmp.gt.f32.partialorder %v1500, 0.0
  %vm1523 = vcmp.gt.f32.partialorder %v1505, 0.0
  %vm1524 = vcmp.gt.f32.partialorder %v1508, 0.0
  %vm1525 = vcmp.gt.f32.partialorder %v1513, 0.0
  %vm1526 = vcmp.gt.f32.partialorder %v1516, 0.0
  %v1527 = vmul.f32 %v1489, 0.01
  %v1528 = vmul.f32 %v1492, 0.01
  %v1529 = vmul.f32 %v1497, 0.01
  %v1530 = vmul.f32 %v1500, 0.01
  %v1531 = vmul.f32 %v1505, 0.01
  %v1532 = vmul.f32 %v1508, 0.01
  %v1533 = vmul.f32 %v1513, 0.01
  %v1534 = vmul.f32 %v1516, 0.01
  %v1535 = vsel %vm1519, %v1489, %v1527
  %v1536 = vsel %vm1520, %v1492, %v1528
  %v1537 = vsel %vm1521, %v1497, %v1529
  %v1538 = vsel %vm1522, %v1500, %v1530
  %v1539 = vsel %vm1523, %v1505, %v1531
  %v1540 = vsel %vm1524, %v1508, %v1532
  %v1541 = vsel %vm1525, %v1513, %v1533
  %v1542 = vsel %vm1526, %v1516, %v1534
  %v1543 = vld [vmem:[%s5] sm:$0x1]
  %v1544 = vpack.c.bf16 %v1536, %v1535
  %v1545 = vpack.c.bf16 %v1538, %v1537
  %v1546 = vpack.c.bf16 %v1540, %v1539
  %v1547 = vpack.c.bf16 %v1542, %v1541
  %v1549 = vsel %vm462, %v1543, 0
  %1551 = vmatprep.subr.bf16.mxu0 0
  %1552 = vmatpush1.bf16.msra.mxu0 0
  %1553 = vmatprep.subr.bf16.mxu0 0
  %1554 = vmatpush1.bf16.msra.mxu0 0
  %1555 = vmatprep.subr.bf16.mxu0 0
  %1556 = vmatpush1.bf16.msra.mxu0 0
  %1557 = vmatprep.subr.bf16.mxu0 0
  %1558 = vmatpush1.bf16.msra.mxu0 0
  %1559 = vmatprep.subr.bf16.mxu0 0
  %1560 = vmatpush1.bf16.msra.mxu0 %v1547
  %1561 = vmatprep.subr.bf16.mxu0 0
  %1562 = vmatpush1.bf16.msra.mxu0 %v1546
  %1563 = vmatprep.subr.bf16.mxu0 0
  %1564 = vmatpush1.bf16.msra.mxu0 %v1545
  %1565 = vmatprep.subr.bf16.mxu0 0
  %1566 = vmatpush1.bf16.msra.mxu0 %v1544
  %1567 = vmatprep.subr.bf16.mxu0 0
  %1568 = vmatpush2.bf16.msra.mxu0 0
  %1569 = vmatprep.subr.bf16.mxu0 0
  %1570 = vmatpush2.bf16.msra.mxu0 0
  %1571 = vmatprep.subr.bf16.mxu0 0
  %1572 = vmatpush2.bf16.msra.mxu0 0
  %1573 = vmatprep.subr.bf16.mxu0 0
  %1574 = vmatpush2.bf16.msra.mxu0 0
  %1575 = vmatprep.subr.bf16.mxu0 0
  %1576 = vmatpush2.bf16.msra.mxu0 0
  %1577 = vmatprep.subr.bf16.mxu0 0
  %1578 = vmatpush2.bf16.msra.mxu0 0
  %1579 = vmatprep.subr.bf16.mxu0 0
  %1580 = vmatpush2.bf16.msra.mxu0 0
  %1581 = vmatprep.subr.bf16.mxu0 0
  %1582 = vmatpush2.bf16.msra.mxu0 0
  %1583 = vmatprep.mubr.bf16.mxu0 0
  %1584 = vmatmul.mubr.bf16.gmra.mxu0 %v1549
  %v1585 = vpop.f32.mrf.mxu0
  %v1586 = vadd.f32 0.0, %v1585
  %v1587 = vpop.f32.mrf.mxu0
  %v1588 = vpop.f32.mrf.mxu0
  %v1589 = vpop.f32.mrf.mxu0
  %1590 = vdwg.mxu0
  %vm1591 = vcmp.gt.f32.partialorder %v1586, 0.0
  %v1592 = vmul.f32 %v1586, 0.01
  %v1593 = vsel %vm1591, %v1586, %v1592
  %v1594 = vpack.c.bf16 %v824, %v824
  %v1595 = vld [vmem:[%s18] sm:$0xff]
  %v1596 = vld [vmem:[%s18 + $0x8] sm:$0xff]
  %v1597 = vld [vmem:[%s18 + $0x10] sm:$0xff]
  %v1598 = vld [vmem:[%s18 + $0x18] sm:$0xff]
  %v1599 = vld [vmem:[%s18 + $0x20] sm:$0xff]
  %v1600 = vld [vmem:[%s18 + $0x28] sm:$0xff]
  %v1601 = vld [vmem:[%s18 + $0x30] sm:$0xff]
  %v1602 = vld [vmem:[%s18 + $0x38] sm:$0xff]
  %v1603 = vld [vmem:[%s18 + $0x40] sm:$0xff]
  %v1604 = vld [vmem:[%s18 + $0x48] sm:$0xff]
  %v1605 = vld [vmem:[%s18 + $0x50] sm:$0xff]
  %v1606 = vld [vmem:[%s18 + $0x58] sm:$0xff]
  %v1607 = vld [vmem:[%s18 + $0x60] sm:$0xff]
  %v1608 = vld [vmem:[%s18 + $0x68] sm:$0xff]
  %v1609 = vld [vmem:[%s18 + $0x70] sm:$0xff]
  %v1610 = vld [vmem:[%s18 + $0x78] sm:$0xff]
  %v1611 = vpack.c.bf16 %v1593, %v1593
  %v1612 = vld [vmem:[%s19] sm:$0xff]
  %v1613 = vld [vmem:[%s19 + $0x8] sm:$0xff]
  %v1614 = vld [vmem:[%s19 + $0x10] sm:$0xff]
  %v1615 = vld [vmem:[%s19 + $0x18] sm:$0xff]
  %v1616 = vld [vmem:[%s19 + $0x20] sm:$0xff]
  %v1617 = vld [vmem:[%s19 + $0x28] sm:$0xff]
  %v1618 = vld [vmem:[%s19 + $0x30] sm:$0xff]
  %v1619 = vld [vmem:[%s19 + $0x38] sm:$0xff]
  %v1620 = vld [vmem:[%s19 + $0x40] sm:$0xff]
  %v1621 = vld [vmem:[%s19 + $0x48] sm:$0xff]
  %v1622 = vld [vmem:[%s19 + $0x50] sm:$0xff]
  %v1623 = vld [vmem:[%s19 + $0x58] sm:$0xff]
  %v1624 = vld [vmem:[%s19 + $0x60] sm:$0xff]
  %v1625 = vld [vmem:[%s19 + $0x68] sm:$0xff]
  %v1626 = vld [vmem:[%s19 + $0x70] sm:$0xff]
  %v1627 = vld [vmem:[%s19 + $0x78] sm:$0xff]
  %v1644 = vunpack.c.l.b16 %v1612
  %v1645 = vunpack.c.h.b16 %v1612
  %v1646 = vunpack.c.l.b16 %v1613
  %v1647 = vunpack.c.h.b16 %v1613
  %v1648 = vunpack.c.l.b16 %v1614
  %v1649 = vunpack.c.h.b16 %v1614
  %v1650 = vunpack.c.l.b16 %v1615
  %v1651 = vunpack.c.h.b16 %v1615
  %v1652 = vunpack.c.l.b16 %v1616
  %v1653 = vunpack.c.h.b16 %v1616
  %v1654 = vunpack.c.l.b16 %v1617
  %v1655 = vunpack.c.h.b16 %v1617
  %v1656 = vunpack.c.l.b16 %v1618
  %v1657 = vunpack.c.h.b16 %v1618
  %v1658 = vunpack.c.l.b16 %v1619
  %v1659 = vunpack.c.h.b16 %v1619
  %v1660 = vunpack.c.l.b16 %v1620
  %v1661 = vunpack.c.h.b16 %v1620
  %v1662 = vunpack.c.l.b16 %v1621
  %v1663 = vunpack.c.h.b16 %v1621
  %v1664 = vunpack.c.l.b16 %v1622
  %v1665 = vunpack.c.h.b16 %v1622
  %v1666 = vunpack.c.l.b16 %v1623
  %v1667 = vunpack.c.h.b16 %v1623
  %v1668 = vunpack.c.l.b16 %v1624
  %v1669 = vunpack.c.h.b16 %v1624
  %v1670 = vunpack.c.l.b16 %v1625
  %v1671 = vunpack.c.h.b16 %v1625
  %v1672 = vunpack.c.l.b16 %v1626
  %v1673 = vunpack.c.h.b16 %v1626
  %v1674 = vunpack.c.l.b16 %v1627
  %v1675 = vunpack.c.h.b16 %v1627
  %v1676 = vpack.c.b16 %v1646, %v1644
  %v1677 = vpack.c.b16 %v1647, %v1645
  %v1678 = vpack.c.b16 %v1650, %v1648
  %v1679 = vpack.c.b16 %v1651, %v1649
  %v1680 = vpack.c.b16 %v1654, %v1652
  %v1681 = vpack.c.b16 %v1655, %v1653
  %v1682 = vpack.c.b16 %v1658, %v1656
  %v1683 = vpack.c.b16 %v1659, %v1657
  %v1684 = vpack.c.b16 %v1662, %v1660
  %v1685 = vpack.c.b16 %v1663, %v1661
  %v1686 = vpack.c.b16 %v1666, %v1664
  %v1687 = vpack.c.b16 %v1667, %v1665
  %v1688 = vpack.c.b16 %v1670, %v1668
  %v1689 = vpack.c.b16 %v1671, %v1669
  %v1690 = vpack.c.b16 %v1674, %v1672
  %v1691 = vpack.c.b16 %v1675, %v1673
  %1708 = vmatprep.subr.bf16.mxu0 %v1691
  %1709 = vmatpush1.bf16.msra.mxu0 %v1690
  %1710 = vmatprep.subr.bf16.mxu0 %v1689
  %1711 = vmatpush1.bf16.msra.mxu0 %v1688
  %1712 = vmatprep.subr.bf16.mxu0 %v1687
  %1713 = vmatpush1.bf16.msra.mxu0 %v1686
  %1714 = vmatprep.subr.bf16.mxu0 %v1685
  %1715 = vmatpush1.bf16.msra.mxu0 %v1684
  %1716 = vmatprep.subr.bf16.mxu0 %v1683
  %1717 = vmatpush1.bf16.msra.mxu0 %v1682
  %1718 = vmatprep.subr.bf16.mxu0 %v1681
  %1719 = vmatpush1.bf16.msra.mxu0 %v1680
  %1720 = vmatprep.subr.bf16.mxu0 %v1679
  %1721 = vmatpush1.bf16.msra.mxu0 %v1678
  %1722 = vmatprep.subr.bf16.mxu0 %v1677
  %1723 = vmatpush1.bf16.msra.mxu0 %v1676
  %1724 = vmatprep.subr.bf16.mxu0 0
  %1725 = vmatpush2.bf16.msra.mxu0 0
  %1726 = vmatprep.subr.bf16.mxu0 0
  %1727 = vmatpush2.bf16.msra.mxu0 0
  %1728 = vmatprep.subr.bf16.mxu0 0
  %1729 = vmatpush2.bf16.msra.mxu0 0
  %1730 = vmatprep.subr.bf16.mxu0 0
  %1731 = vmatpush2.bf16.msra.mxu0 0
  %1732 = vmatprep.subr.bf16.mxu0 0
  %1733 = vmatpush2.bf16.msra.mxu0 0
  %1734 = vmatprep.subr.bf16.mxu0 0
  %1735 = vmatpush2.bf16.msra.mxu0 0
  %1736 = vmatprep.subr.bf16.mxu0 0
  %1737 = vmatpush2.bf16.msra.mxu0 0
  %1738 = vmatprep.subr.bf16.mxu0 0
  %1739 = vmatpush2.bf16.msra.mxu0 0
  %1740 = vmatprep.mubr.bf16.mxu0 0
  %1741 = vmatmul.mubr.bf16.gmra.mxu0 %v1611
  %v1742 = vpop.f32.mrf.mxu0
  %v1743 = vadd.f32 0.0, %v1742
  %v1744 = vpop.f32.mrf.mxu0
  %v1745 = vadd.f32 0.0, %v1744
  %v1746 = vpop.f32.mrf.mxu0
  %v1747 = vpop.f32.mrf.mxu0
  %1748 = vdwg.mxu0
  %v1765 = vunpack.c.l.b16 %v1595
  %v1766 = vunpack.c.h.b16 %v1595
  %v1767 = vunpack.c.l.b16 %v1596
  %v1768 = vunpack.c.h.b16 %v1596
  %v1769 = vunpack.c.l.b16 %v1597
  %v1770 = vunpack.c.h.b16 %v1597
  %v1771 = vunpack.c.l.b16 %v1598
  %v1772 = vunpack.c.h.b16 %v1598
  %v1773 = vunpack.c.l.b16 %v1599
  %v1774 = vunpack.c.h.b16 %v1599
  %v1775 = vunpack.c.l.b16 %v1600
  %v1776 = vunpack.c.h.b16 %v1600
  %v1777 = vunpack.c.l.b16 %v1601
  %v1778 = vunpack.c.h.b16 %v1601
  %v1779 = vunpack.c.l.b16 %v1602
  %v1780 = vunpack.c.h.b16 %v1602
  %v1781 = vunpack.c.l.b16 %v1603
  %v1782 = vunpack.c.h.b16 %v1603
  %v1783 = vunpack.c.l.b16 %v1604
  %v1784 = vunpack.c.h.b16 %v1604
  %v1785 = vunpack.c.l.b16 %v1605
  %v1786 = vunpack.c.h.b16 %v1605
  %v1787 = vunpack.c.l.b16 %v1606
  %v1788 = vunpack.c.h.b16 %v1606
  %v1789 = vunpack.c.l.b16 %v1607
  %v1790 = vunpack.c.h.b16 %v1607
  %v1791 = vunpack.c.l.b16 %v1608
  %v1792 = vunpack.c.h.b16 %v1608
  %v1793 = vunpack.c.l.b16 %v1609
  %v1794 = vunpack.c.h.b16 %v1609
  %v1795 = vunpack.c.l.b16 %v1610
  %v1796 = vunpack.c.h.b16 %v1610
  %v1797 = vpack.c.b16 %v1767, %v1765
  %v1798 = vpack.c.b16 %v1768, %v1766
  %v1799 = vpack.c.b16 %v1771, %v1769
  %v1800 = vpack.c.b16 %v1772, %v1770
  %v1801 = vpack.c.b16 %v1775, %v1773
  %v1802 = vpack.c.b16 %v1776, %v1774
  %v1803 = vpack.c.b16 %v1779, %v1777
  %v1804 = vpack.c.b16 %v1780, %v1778
  %v1805 = vpack.c.b16 %v1783, %v1781
  %v1806 = vpack.c.b16 %v1784, %v1782
  %v1807 = vpack.c.b16 %v1787, %v1785
  %v1808 = vpack.c.b16 %v1788, %v1786
  %v1809 = vpack.c.b16 %v1791, %v1789
  %v1810 = vpack.c.b16 %v1792, %v1790
  %v1811 = vpack.c.b16 %v1795, %v1793
  %v1812 = vpack.c.b16 %v1796, %v1794
  %1829 = vmatprep.subr.bf16.mxu0 %v1812
  %1830 = vmatpush1.bf16.msra.mxu0 %v1811
  %1831 = vmatprep.subr.bf16.mxu0 %v1810
  %1832 = vmatpush1.bf16.msra.mxu0 %v1809
  %1833 = vmatprep.subr.bf16.mxu0 %v1808
  %1834 = vmatpush1.bf16.msra.mxu0 %v1807
  %1835 = vmatprep.subr.bf16.mxu0 %v1806
  %1836 = vmatpush1.bf16.msra.mxu0 %v1805
  %1837 = vmatprep.subr.bf16.mxu0 %v1804
  %1838 = vmatpush1.bf16.msra.mxu0 %v1803
  %1839 = vmatprep.subr.bf16.mxu0 %v1802
  %1840 = vmatpush1.bf16.msra.mxu0 %v1801
  %1841 = vmatprep.subr.bf16.mxu0 %v1800
  %1842 = vmatpush1.bf16.msra.mxu0 %v1799
  %1843 = vmatprep.subr.bf16.mxu0 %v1798
  %1844 = vmatpush1.bf16.msra.mxu0 %v1797
  %1845 = vmatprep.subr.bf16.mxu0 0
  %1846 = vmatpush2.bf16.msra.mxu0 0
  %1847 = vmatprep.subr.bf16.mxu0 0
  %1848 = vmatpush2.bf16.msra.mxu0 0
  %1849 = vmatprep.subr.bf16.mxu0 0
  %1850 = vmatpush2.bf16.msra.mxu0 0
  %1851 = vmatprep.subr.bf16.mxu0 0
  %1852 = vmatpush2.bf16.msra.mxu0 0
  %1853 = vmatprep.subr.bf16.mxu0 0
  %1854 = vmatpush2.bf16.msra.mxu0 0
  %1855 = vmatprep.subr.bf16.mxu0 0
  %1856 = vmatpush2.bf16.msra.mxu0 0
  %1857 = vmatprep.subr.bf16.mxu0 0
  %1858 = vmatpush2.bf16.msra.mxu0 0
  %1859 = vmatprep.subr.bf16.mxu0 0
  %1860 = vmatpush2.bf16.msra.mxu0 0
  %1861 = vmatprep.mubr.bf16.mxu0 0
  %1862 = vmatmul.mubr.bf16.gmra.mxu0 %v1594
  %v1863 = vpop.f32.mrf.mxu0
  %v1864 = vadd.f32 %v1743, %v1863
  %v1865 = vpop.f32.mrf.mxu0
  %v1866 = vadd.f32 %v1745, %v1865
  %v1867 = vpop.f32.mrf.mxu0
  %v1868 = vpop.f32.mrf.mxu0
  %1869 = vdwg.mxu0
  %v1870 = vld [vmem:[%s20] sm:$0x3]
  %v1872 = vlaneseq
  %v1873 = vshrl.u32 %v1872, 7
  %v1874 = vsub.s32 0, %v1873
  %v1875 = vrot.slane %v1870, %v1874
  %v1876 = vlaneseq
  %v1877 = vshrl.u32 %v1876, 7
  %v1878 = vsub.s32 1, %v1877
  %v1879 = vrot.slane %v1870, %v1878
  %v1882 = vadd.f32 %v1864, %v1875
  %v1883 = vadd.f32 %v1866, %v1879
  %vm1884 = vcmp.gt.f32.partialorder %v1882, 0.0
  %vm1885 = vcmp.gt.f32.partialorder %v1883, 0.0
  %v1886 = vmul.f32 %v1882, 0.01
  %v1887 = vmul.f32 %v1883, 0.01
  %v1888 = vsel %vm1884, %v1882, %v1886
  %v1889 = vsel %vm1885, %v1883, %v1887
  %v1890 = vpack.c.bf16 %v1888, %v1888
  %v1891 = vpack.c.bf16 %v1889, %v1889
  %v1892 = vld [vmem:[%s21] sm:$0xf]
  %v1893 = vld [vmem:[%s21 + $0x4] sm:$0xf]
  %v1894 = vld [vmem:[%s21 + $0x8] sm:$0xf]
  %v1895 = vld [vmem:[%s21 + $0xc] sm:$0xf]
  %v1896 = vld [vmem:[%s21 + $0x10] sm:$0xf]
  %v1897 = vld [vmem:[%s21 + $0x14] sm:$0xf]
  %v1898 = vld [vmem:[%s21 + $0x18] sm:$0xf]
  %v1899 = vld [vmem:[%s21 + $0x1c] sm:$0xf]
  %v1900 = vld [vmem:[%s21 + $0x20] sm:$0xf]
  %v1901 = vld [vmem:[%s21 + $0x24] sm:$0xf]
  %v1902 = vld [vmem:[%s21 + $0x28] sm:$0xf]
  %v1903 = vld [vmem:[%s21 + $0x2c] sm:$0xf]
  %v1904 = vld [vmem:[%s21 + $0x30] sm:$0xf]
  %v1905 = vld [vmem:[%s21 + $0x34] sm:$0xf]
  %v1906 = vld [vmem:[%s21 + $0x38] sm:$0xf]
  %v1907 = vld [vmem:[%s21 + $0x3c] sm:$0xf]
  %v1908 = vld [vmem:[%s21 + $0x40] sm:$0xf]
  %v1909 = vld [vmem:[%s21 + $0x44] sm:$0xf]
  %v1910 = vld [vmem:[%s21 + $0x48] sm:$0xf]
  %v1911 = vld [vmem:[%s21 + $0x4c] sm:$0xf]
  %v1912 = vld [vmem:[%s21 + $0x50] sm:$0xf]
  %v1913 = vld [vmem:[%s21 + $0x54] sm:$0xf]
  %v1914 = vld [vmem:[%s21 + $0x58] sm:$0xf]
  %v1915 = vld [vmem:[%s21 + $0x5c] sm:$0xf]
  %v1916 = vld [vmem:[%s21 + $0x60] sm:$0xf]
  %v1917 = vld [vmem:[%s21 + $0x64] sm:$0xf]
  %v1918 = vld [vmem:[%s21 + $0x68] sm:$0xf]
  %v1919 = vld [vmem:[%s21 + $0x6c] sm:$0xf]
  %v1920 = vld [vmem:[%s21 + $0x70] sm:$0xf]
  %v1921 = vld [vmem:[%s21 + $0x74] sm:$0xf]
  %v1922 = vld [vmem:[%s21 + $0x78] sm:$0xf]
  %v1923 = vld [vmem:[%s21 + $0x7c] sm:$0xf]
  %v1924 = vld [vmem:[%s22] sm:$0x1]
  %v1926 = vlaneseq
  %v1927 = vshrl.u32 %v1926, 7
  %v1928 = vsub.s32 0, %v1927
  %v1929 = vrot.slane %v1924, %v1928
  %v1963 = vunpack.c.l.b16 %v1892
  %v1964 = vunpack.c.l.b16 %v1893
  %v1965 = vunpack.c.l.b16 %v1894
  %v1966 = vunpack.c.l.b16 %v1895
  %v1967 = vunpack.c.l.b16 %v1896
  %v1968 = vunpack.c.l.b16 %v1897
  %v1969 = vunpack.c.l.b16 %v1898
  %v1970 = vunpack.c.l.b16 %v1899
  %v1971 = vunpack.c.l.b16 %v1900
  %v1972 = vunpack.c.l.b16 %v1901
  %v1973 = vunpack.c.l.b16 %v1902
  %v1974 = vunpack.c.l.b16 %v1903
  %v1975 = vunpack.c.l.b16 %v1904
  %v1976 = vunpack.c.l.b16 %v1905
  %v1977 = vunpack.c.l.b16 %v1906
  %v1978 = vunpack.c.l.b16 %v1907
  %v1979 = vunpack.c.l.b16 %v1908
  %v1980 = vunpack.c.l.b16 %v1909
  %v1981 = vunpack.c.l.b16 %v1910
  %v1982 = vunpack.c.l.b16 %v1911
  %v1983 = vunpack.c.l.b16 %v1912
  %v1984 = vunpack.c.l.b16 %v1913
  %v1985 = vunpack.c.l.b16 %v1914
  %v1986 = vunpack.c.l.b16 %v1915
  %v1987 = vunpack.c.l.b16 %v1916
  %v1988 = vunpack.c.l.b16 %v1917
  %v1989 = vunpack.c.l.b16 %v1918
  %v1990 = vunpack.c.l.b16 %v1919
  %v1991 = vunpack.c.l.b16 %v1920
  %v1992 = vunpack.c.l.b16 %v1921
  %v1993 = vunpack.c.l.b16 %v1922
  %v1994 = vunpack.c.l.b16 %v1923
  %v1995 = vpack.c.b16 %v1964, %v1963
  %v1996 = vpack.c.b16 %v1966, %v1965
  %v1997 = vpack.c.b16 %v1968, %v1967
  %v1998 = vpack.c.b16 %v1970, %v1969
  %v1999 = vpack.c.b16 %v1972, %v1971
  %v2000 = vpack.c.b16 %v1974, %v1973
  %v2001 = vpack.c.b16 %v1976, %v1975
  %v2002 = vpack.c.b16 %v1978, %v1977
  %v2003 = vpack.c.b16 %v1980, %v1979
  %v2004 = vpack.c.b16 %v1982, %v1981
  %v2005 = vpack.c.b16 %v1984, %v1983
  %v2006 = vpack.c.b16 %v1986, %v1985
  %v2007 = vpack.c.b16 %v1988, %v1987
  %v2008 = vpack.c.b16 %v1990, %v1989
  %v2009 = vpack.c.b16 %v1992, %v1991
  %v2010 = vpack.c.b16 %v1994, %v1993
  %2027 = vmatprep.subr.bf16.mxu0 0
  %2028 = vmatpush1.bf16.msra.mxu0 %v2002
  %2029 = vmatprep.subr.bf16.mxu0 0
  %2030 = vmatpush1.bf16.msra.mxu0 %v2001
  %2031 = vmatprep.subr.bf16.mxu0 0
  %2032 = vmatpush1.bf16.msra.mxu0 %v2000
  %2033 = vmatprep.subr.bf16.mxu0 0
  %2034 = vmatpush1.bf16.msra.mxu0 %v1999
  %2035 = vmatprep.subr.bf16.mxu0 0
  %2036 = vmatpush1.bf16.msra.mxu0 %v1998
  %2037 = vmatprep.subr.bf16.mxu0 0
  %2038 = vmatpush1.bf16.msra.mxu0 %v1997
  %2039 = vmatprep.subr.bf16.mxu0 0
  %2040 = vmatpush1.bf16.msra.mxu0 %v1996
  %2041 = vmatprep.subr.bf16.mxu0 0
  %2042 = vmatpush1.bf16.msra.mxu0 %v1995
  %2043 = vmatprep.subr.bf16.mxu0 0
  %2044 = vmatpush2.bf16.msra.mxu0 %v2010
  %2045 = vmatprep.subr.bf16.mxu0 0
  %2046 = vmatpush2.bf16.msra.mxu0 %v2009
  %2047 = vmatprep.subr.bf16.mxu0 0
  %2048 = vmatpush2.bf16.msra.mxu0 %v2008
  %2049 = vmatprep.subr.bf16.mxu0 0
  %2050 = vmatpush2.bf16.msra.mxu0 %v2007
  %2051 = vmatprep.subr.bf16.mxu0 0
  %2052 = vmatpush2.bf16.msra.mxu0 %v2006
  %2053 = vmatprep.subr.bf16.mxu0 0
  %2054 = vmatpush2.bf16.msra.mxu0 %v2005
  %2055 = vmatprep.subr.bf16.mxu0 0
  %2056 = vmatpush2.bf16.msra.mxu0 %v2004
  %2057 = vmatprep.subr.bf16.mxu0 0
  %2058 = vmatpush2.bf16.msra.mxu0 %v2003
  %2059 = vmatprep.mubr.bf16.mxu0 %v1891
  %2060 = vmatmul.mubr.bf16.gmra.mxu0 %v1890
  %v2061 = vpop.f32.mrf.mxu0
  %v2062 = vadd.f32 %v1929, %v2061
  %v2063 = vpop.f32.mrf.mxu0
  %v2064 = vpop.f32.mrf.mxu0
  %v2065 = vpop.f32.mrf.mxu0
  %2066 = vdwg.mxu0
  %vm2067 = vcmp.gt.f32.partialorder %v2062, 0.0
  %v2068 = vmul.f32 %v2062, 0.01
  %v2069 = vsel %vm2067, %v2062, %v2068
  %v2070 = vpack.c.bf16 %v2069, %v2069
  %v2071 = vld [vmem:[%s23] sm:$0xf]
  %v2072 = vld [vmem:[%s23 + $0x4] sm:$0xf]
  %v2073 = vld [vmem:[%s23 + $0x8] sm:$0xf]
  %v2074 = vld [vmem:[%s23 + $0xc] sm:$0xf]
  %v2075 = vld [vmem:[%s23 + $0x10] sm:$0xf]
  %v2076 = vld [vmem:[%s23 + $0x14] sm:$0xf]
  %v2077 = vld [vmem:[%s23 + $0x18] sm:$0xf]
  %v2078 = vld [vmem:[%s23 + $0x1c] sm:$0xf]
  %v2079 = vld [vmem:[%s24] sm:$0x1]
  %v2081 = vlaneseq
  %v2082 = vshrl.u32 %v2081, 7
  %v2083 = vsub.s32 0, %v2082
  %v2084 = vrot.slane %v2079, %v2083
  %v2094 = vunpack.c.l.b16 %v2071
  %v2095 = vunpack.c.l.b16 %v2072
  %v2096 = vunpack.c.l.b16 %v2073
  %v2097 = vunpack.c.l.b16 %v2074
  %v2098 = vunpack.c.l.b16 %v2075
  %v2099 = vunpack.c.l.b16 %v2076
  %v2100 = vunpack.c.l.b16 %v2077
  %v2101 = vunpack.c.l.b16 %v2078
  %v2102 = vpack.c.b16 %v2095, %v2094
  %v2103 = vpack.c.b16 %v2097, %v2096
  %v2104 = vpack.c.b16 %v2099, %v2098
  %v2105 = vpack.c.b16 %v2101, %v2100
  %v2111 = vsel %vm462, %v2070, 0
  %2113 = vmatprep.subr.bf16.mxu0 0
  %2114 = vmatpush1.bf16.msra.mxu0 0
  %2115 = vmatprep.subr.bf16.mxu0 0
  %2116 = vmatpush1.bf16.msra.mxu0 0
  %2117 = vmatprep.subr.bf16.mxu0 0
  %2118 = vmatpush1.bf16.msra.mxu0 0
  %2119 = vmatprep.subr.bf16.mxu0 0
  %2120 = vmatpush1.bf16.msra.mxu0 0
  %2121 = vmatprep.subr.bf16.mxu0 0
  %2122 = vmatpush1.bf16.msra.mxu0 %v2105
  %2123 = vmatprep.subr.bf16.mxu0 0
  %2124 = vmatpush1.bf16.msra.mxu0 %v2104
  %2125 = vmatprep.subr.bf16.mxu0 0
  %2126 = vmatpush1.bf16.msra.mxu0 %v2103
  %2127 = vmatprep.subr.bf16.mxu0 0
  %2128 = vmatpush1.bf16.msra.mxu0 %v2102
  %2129 = vmatprep.subr.bf16.mxu0 0
  %2130 = vmatpush2.bf16.msra.mxu0 0
  %2131 = vmatprep.subr.bf16.mxu0 0
  %2132 = vmatpush2.bf16.msra.mxu0 0
  %2133 = vmatprep.subr.bf16.mxu0 0
  %2134 = vmatpush2.bf16.msra.mxu0 0
  %2135 = vmatprep.subr.bf16.mxu0 0
  %2136 = vmatpush2.bf16.msra.mxu0 0
  %2137 = vmatprep.subr.bf16.mxu0 0
  %2138 = vmatpush2.bf16.msra.mxu0 0
  %2139 = vmatprep.subr.bf16.mxu0 0
  %2140 = vmatpush2.bf16.msra.mxu0 0
  %2141 = vmatprep.subr.bf16.mxu0 0
  %2142 = vmatpush2.bf16.msra.mxu0 0
  %2143 = vmatprep.subr.bf16.mxu0 0
  %2144 = vmatpush2.bf16.msra.mxu0 0
  %2145 = vmatprep.mubr.bf16.mxu0 0
  %2146 = vmatmul.mubr.bf16.gmra.mxu0 %v2111
  %v2147 = vpop.f32.mrf.mxu0
  %v2148 = vadd.f32 %v2084, %v2147
  %v2149 = vpop.f32.mrf.mxu0
  %v2150 = vpop.f32.mrf.mxu0
  %v2151 = vpop.f32.mrf.mxu0
  %2152 = vdwg.mxu0
  %v2153 = vxor.u32 %v2148, 2147483648
  %v2154 = vmul.f32 %v2153, 1.442695
  %v2155 = vpow.pop %v2154
  %v2156 = vadd.f32 %v2155, 1.0
  %v2157 = vrcp.pop %v2156
  %v2158 = vmul.f32 1.0, %v2157
  %2159 = vst [vmem:[%s25] sm:$0x3] %v2158
  // Predicated region
  $region102: #{attgnn_forward.1} parent=0 // pred_check
    _
  $region103: #{attgnn_forward.1} parent=0 // pred_check_branch
    %2161 = sbr.rel (0) target = $region105
  $region104: #{attgnn_forward.1} parent=0 // pred_region
    _
  $region105: #{attgnn_forward.1} parent=0 // pred_fallthru
    _
  // Predicated region
  $region106: #{attgnn_forward.1} parent=0 // pred_check
    _
  $region107: #{attgnn_forward.1} parent=0 // pred_check_branch
    %2163 = sbr.rel (0) target = $region109
  $region108: #{attgnn_forward.1} parent=0 // pred_region
    _
  $region109: #{attgnn_forward.1} parent=0 // pred_fallthru
    _

</llo_original>
